<compile_context>
chip_gen: v7x
topology: tpu7x:2x2x1
jax: 0.10.0
libtpu: 0.0.40
codegen_flags: <defaults>
</compile_context>

<pallas_src>
import math

import jax
import jax.numpy as jnp
from jax.experimental import pallas as pl
from jax.experimental.pallas import tpu as pltpu

NUM_FUSED = 2
WEIGHTED_FUSION = False      # module default
EPS = 1e-6                   # fusion-weight eps (matches forward(eps=1e-06))
BN_EPS = 1e-5                # nn.BatchNorm2d default eps


# ---------------------------------------------------------------------------
# VMEM budgeting / tile selection (generation aware)
# ---------------------------------------------------------------------------
def _vmem_capacity_bytes():
    try:
        return int(pltpu.get_tpu_info().vmem_capacity_bytes)
    except Exception:
        return 64 << 20      # conservative default (v7x per-TensorCore VMEM)


def _vmem_estimate(H, W, C, TH, out_bytes):
    """Rough per-grid-step VMEM need: double-buffered pallas operands plus the
    single-buffered in-kernel temporaries (upsample, im2col patch, f32 acc)."""
    bf = 2
    Wh = W // 2
    f0_plane = (H + 2) * (W + 2) * C * bf
    f1_plane = (H // 2 + 2) * (Wh + 2) * C * bf
    out_tile = C * TH * W * out_bytes
    weights = 9 * C * C * bf + C * 4
    tmp = ((TH + 2) * (W + 2) * C * (4 + bf)          # fused f32 + bf16
           + (TH + 2) * (W + 4) * C * bf              # on-chip upsampled f1
           + (TH + 2) * W * 3 * C * bf * 2            # kx-concat + flattened
           + TH * W * 9 * C * bf                      # im2col patch
           + C * TH * W * 4)                          # matmul f32 result
    return 2 * (f0_plane + f1_plane + out_tile) + weights + tmp


def _pick_tile_h(H, W, C, B, vmem_cap, out_bytes):
    """Largest even row tile TH dividing H that fits ~80% of per-core VMEM.
    TH < H requires (TH*W) % 128 == 0 (lane-aligned output block); TH == H is
    always legal (full-dim block).  If B == 1, prefer >= 2 tiles so the second
    v7x TensorCore gets work."""
    budget = (vmem_cap * 4) // 5
    cands = [H] + [th for th in range(H - 2, 1, -2)
                   if H % th == 0 and (th * W) % 128 == 0]
    fitting = [th for th in cands
               if _vmem_estimate(H, W, C, th, out_bytes) <= budget]
    if not fitting:
        # Even the resident input planes blow the budget; take the smallest
        # tile and let the compiler try.
        # TODO(synk): switch to manual-DMA haloed windows for this case.
        return cands[-1]
    th = fitting[0]
    if B == 1 and th == H:
        smaller = [x for x in fitting if x < H]
        if smaller:
            th = smaller[0]
    return th


# ---------------------------------------------------------------------------
# Fused kernel: on-chip 2x nearest upsample + sum + 3x3 conv (single K=9C
# matmul over a hoisted-shift im2col patch) + folded-BN bias + ReLU.
#   f0_ref: (1, H+2, W+2, C)        bf16  full-res padded plane (resident per b)
#   f1_ref: (1, H/2+2, W/2+2, C)    bf16  half-res padded plane (resident per b)
#   w_ref : (C, 9C)                 bf16  conv weights, BN scale folded in
#   b_ref : (C, 1)                  f32   BN bias (beta - mean*scale)
#   o_ref : (1, C, TH*W)                  channel-major (NCHW) output tile
# ---------------------------------------------------------------------------
def _make_fuse_kernel(weighted, TH, W, C):
    THH = TH // 2
    Wh = W // 2

    def kernel(*refs):
        if weighted:
            fw_ref, f0_ref, f1_ref, w_ref, b_ref, o_ref = refs
        else:
            f0_ref, f1_ref, w_ref, b_ref, o_ref = refs

        t = pl.program_id(1)

        # Haloed row window of the full-res padded plane: a leading-axis
        # dynamic slice of the resident VMEM ref (no HBM duplication).
        f0t = f0_ref[0, pl.ds(t * TH, TH + 2)]                 # (TH+2, W+2, C)

        # ---- on-chip nearest-2x upsample of the half-res stream ------------
        g = f1_ref[0, pl.ds(t * THH, THH + 2)]                 # (THH+2, Wh+2, C)
        # rows: duplicate interior rows; g's first/last rows are already the
        # correct half-step halo rows (or the zero pad rows at the borders).
        mid = g[1:THH + 1]
        mid = jnp.broadcast_to(mid[:, None],
                               (THH, 2, Wh + 2, C)).reshape(TH, Wh + 2, C)
        rows = jnp.concatenate([g[0:1], mid, g[THH + 1:THH + 2]], axis=0)
        # cols: duplicate every column (incl. the zero pad cols) and crop so
        # the result lines up with the 1-px padded full-res plane.
        dup = jnp.broadcast_to(rows[:, :, None], (TH + 2, Wh + 2, 2, C))
        dup = dup.reshape(TH + 2, 2 * Wh + 4, C)
        up = dup[:, 1:W + 3]                                   # (TH+2, W+2, C)

        # ---- feature fusion: f32 add (native on v5e VALU), one bf16 cast ---
        if weighted:
            w0 = fw_ref[0]
            w1 = fw_ref[1]
            fused = f0t.astype(jnp.float32) * w0 + up.astype(jnp.float32) * w1
        else:
            fused = f0t.astype(jnp.float32) + up.astype(jnp.float32)
        fused = fused.astype(jnp.bfloat16)                     # (TH+2, W+2, C)

        # ---- im2col with hoisted shifts ------------------------------------
        # 3 kx column shifts done ONCE (lane concat) + ONE flatten; the 3 ky
        # taps are then free row-range slices at sublane-aligned offsets.
        f3 = jnp.concatenate(
            [fused[:, 0:W], fused[:, 1:W + 1], fused[:, 2:W + 2]],
            axis=-1)                                           # (TH+2, W, 3C)
        s = f3.reshape((TH + 2) * W, 3 * C)
        patch = jnp.concatenate(
            [s[0:TH * W], s[W:(TH + 1) * W], s[2 * W:(TH + 2) * W]],
            axis=-1)                                           # (TH*W, 9C)

        # ---- single MXU matmul, K = 9C, f32 accumulation --------------------
        acc = jax.lax.dot_general(
            w_ref[...], patch,
            dimension_numbers=(((1,), (1,)), ((), ())),
            preferred_element_type=jnp.float32)                # (C, TH*W)

        # folded-BN bias + ReLU; lane-dense, already channel-major (NCHW).
        o_ref[0] = jnp.maximum(acc + b_ref[...], 0.0).astype(o_ref.dtype)

    return kernel


# ---------------------------------------------------------------------------
# Wrapper implementing Fuse.forward
# ---------------------------------------------------------------------------
def fuse_forward(features, conv_w, bn_gamma, bn_beta, bn_mean, bn_var,
                 fusion_w=None, eps=EPS, out_dtype=jnp.float32):
    """features: list of NCHW arrays; features[-1] has half the spatial size
    and is nearest-upsampled 2x (resize='up', upsample='nearest').
    out_dtype=jnp.bfloat16 halves the output HBM stream if downstream allows."""
    assert len(features) >= 2
    *fulls, flast = features
    weighted = fusion_w is not None
    fw_pair = None
    if weighted:
        ww = jax.nn.relu(fusion_w.astype(jnp.float32))
        ww = ww / (jnp.sum(ww) + eps)

    if len(fulls) == 1:
        f0 = fulls[0]
        if weighted:
            fw_pair = jnp.stack([ww[0], ww[-1]])
    else:
        # TODO(synk): >2 fused inputs (non-default config) are pre-summed in
        # XLA glue; the kernel always sees one full-res stream + the resized one.
        if weighted:
            f0 = fulls[0] * ww[0]
            for i in range(1, len(fulls)):
                f0 = f0 + fulls[i] * ww[i]
            fw_pair = jnp.stack([jnp.array(1.0, jnp.float32), ww[-1]])
        else:
            f0 = fulls[0]
            for i in range(1, len(fulls)):
                f0 = f0 + fulls[i]

    B, C, H, W = f0.shape
    assert H % 2 == 0 and W % 2 == 0
    assert flast.shape[2] == H // 2 and flast.shape[3] == W // 2

    out_bytes = jnp.dtype(out_dtype).itemsize
    vmem_cap = _vmem_capacity_bytes()
    TH = _pick_tile_h(H, W, C, B, vmem_cap, out_bytes)
    n_th = H // TH

    # ---- layout glue (rides along the mandatory NCHW -> channels-last pass):
    # transpose + cast to bf16 + 1-px zero pad.  No gather, no W-repeat.
    f0_pad = jnp.pad(jnp.transpose(f0, (0, 2, 3, 1)).astype(jnp.bfloat16),
                     ((0, 0), (1, 1), (1, 1), (0, 0)))          # (B,H+2,W+2,C)
    f1_pad = jnp.pad(jnp.transpose(flast, (0, 2, 3, 1)).astype(jnp.bfloat16),
                     ((0, 0), (1, 1), (1, 1), (0, 0)))          # (B,H/2+2,W/2+2,C)

    # ---- fold BatchNorm (inference) into conv weights / bias; bf16 weights.
    # w9[o, ky*3C + kx*C + ci] = conv_w[o,ci,ky,kx] * scale[o]  (matches patch)
    scale = bn_gamma / jnp.sqrt(bn_var + BN_EPS)                 # (C,)
    w_fold = conv_w * scale[:, None, None, None]                 # (Co,Ci,3,3)
    w9 = jnp.transpose(w_fold, (0, 2, 3, 1)).reshape(C, 9 * C).astype(jnp.bfloat16)
    bias = (bn_beta - bn_mean * scale).reshape(C, 1).astype(jnp.float32)

    kernel = _make_fuse_kernel(weighted, TH, W, C)

    # Full-plane input blocks, index constant along the t axis -> resident in
    # VMEM across the row tiles of one batch (no haloed duplication in HBM).
    in_specs = [
        pl.BlockSpec((1, H + 2, W + 2, C), lambda b, t, *_: (b, 0, 0, 0)),
        pl.BlockSpec((1, H // 2 + 2, W // 2 + 2, C), lambda b, t, *_: (b, 0, 0, 0)),
        pl.BlockSpec((C, 9 * C), lambda b, t, *_: (0, 0)),       # resident weights
        pl.BlockSpec((C, 1), lambda b, t, *_: (0, 0)),           # resident bias
    ]
    out_spec = pl.BlockSpec((1, C, TH * W), lambda b, t, *_: (b, 0, t))

    grid_spec = pltpu.PrefetchScalarGridSpec(
        num_scalar_prefetch=1 if weighted else 0,
        grid=(B, n_th),
        in_specs=in_specs,
        out_specs=out_spec,
    )

    est = _vmem_estimate(H, W, C, TH, out_bytes)
    vmem_limit = int(min(vmem_cap * 9 // 10, max(2 * est, 32 << 20)))

    flops = 2 * 9 * C * C * H * W * B
    bytes_accessed = int(f0_pad.size * 2 + f1_pad.size * 2 + w9.size * 2
                         + bias.size * 4 + B * C * H * W * out_bytes)
    cost = pl.CostEstimate(flops=flops, transcendentals=0,
                           bytes_accessed=bytes_accessed)

    call = pl.pallas_call(
        kernel,
        out_shape=jax.ShapeDtypeStruct((B, C, H * W), out_dtype),
        grid_spec=grid_spec,
        compiler_params=pltpu.CompilerParams(
            dimension_semantics=("parallel", "parallel"),
            vmem_limit_bytes=vmem_limit),
        cost_estimate=cost,
    )
    if weighted:
        out = call(fw_pair, f0_pad, f1_pad, w9, bias)
    else:
        out = call(f0_pad, f1_pad, w9, bias)

    return out.reshape(B, C, H, W)                 # already NCHW, no transpose


# ---------------------------------------------------------------------------
# Pure-JAX reference (mirrors the PyTorch forward) for a correctness check.
# ---------------------------------------------------------------------------
def _reference(features, conv_w, bn_gamma, bn_beta, bn_mean, bn_var,
               fusion_w=None, eps=EPS):
    last = features[-1]
    last = jnp.repeat(jnp.repeat(last, 2, axis=2), 2, axis=3)   # NCHW nearest 2x
    if fusion_w is not None:
        ww = jax.nn.relu(fusion_w)
        ww = ww / (jnp.sum(ww) + eps)
        out = features[0] * ww[0]
        for i in range(1, len(features) - 1):
            out = out + features[i] * ww[i]
        out = out + last * ww[-1]
    else:
        out = features[0]
        for i in range(1, len(features) - 1):
            out = out + features[i]
        out = out + last
    y = jax.lax.conv_general_dilated(
        out, conv_w, window_strides=(1, 1), padding="SAME",
        dimension_numbers=("NCHW", "OIHW", "NCHW"))
    s = (bn_gamma / jnp.sqrt(bn_var + BN_EPS)).reshape(1, -1, 1, 1)
    bb = (bn_beta - bn_mean * bn_gamma / jnp.sqrt(bn_var + BN_EPS)).reshape(1, -1, 1, 1)
    return jnp.maximum(y * s + bb, 0.0)


if __name__ == "__main__":
    B, C, H, W = 2, 8, 16, 16
    key = jax.random.PRNGKey(0)
    k0, k1, k2, k3, k4, k5, k6 = jax.random.split(key, 7)

    # inputs (NCHW, PyTorch convention); last feature has half spatial size
    f0 = jax.random.normal(k0, (B, C, H, W), jnp.float32)
    f1 = jax.random.normal(k1, (B, C, H // 2, W // 2), jnp.float32)
    features = [f0, f1]

    # output_conv: Conv2d(C, C, 3, padding=1, bias=False), kaiming fan_out init
    fan_out = C * 3 * 3
    conv_w = jax.random.normal(k2, (C, C, 3, 3), jnp.float32) * math.sqrt(2.0 / fan_out)

    # BatchNorm2d(C) — inference mode with synthetic (deterministic) stats
    bn_gamma = 1.0 + 0.1 * jax.random.normal(k3, (C,), jnp.float32)
    bn_beta = 0.1 * jax.random.normal(k4, (C,), jnp.float32)
    bn_mean = 0.05 * jax.random.normal(k5, (C,), jnp.float32)
    bn_var = 0.5 + jax.random.uniform(k6, (C,), jnp.float32)

    fusion_w = jnp.ones((NUM_FUSED,), jnp.float32) if WEIGHTED_FUSION else None

    out = fuse_forward(features, conv_w, bn_gamma, bn_beta, bn_mean, bn_var,
                       fusion_w=fusion_w)
    out = jax.block_until_ready(out)

    ref = _reference(features, conv_w, bn_gamma, bn_beta, bn_mean, bn_var,
                     fusion_w=fusion_w)
    assert out.shape == (B, C, H, W)
    # bf16 MXU feed -> looser tolerance than the pure-f32 reference
    assert jnp.allclose(out, ref, rtol=3e-2, atol=3e-2), "mismatch vs reference"

    print("KERNEL_OK")
</pallas_src>

<mosaic_0001>
module attributes {stable_mosaic.version = 11 : i64} {
  func.func @kernel(%arg0: i32, %arg1: i32, %arg2: memref<1x18x18x8xbf16, #tpu.memory_space<vmem>>, %arg3: memref<1x10x10x8xbf16, #tpu.memory_space<vmem>>, %arg4: memref<8x72xbf16, #tpu.memory_space<vmem>>, %arg5: memref<8x1xf32, #tpu.memory_space<vmem>>, %arg6: memref<1x8x256xf32, #tpu.memory_space<vmem>>) attributes {dimension_semantics = [#tpu.dimension_semantics<parallel>, #tpu.dimension_semantics<parallel>], iteration_bounds = array<i64: 2, 1>, scalar_prefetch = 0 : i64, scratch_operands = 0 : i64, tpu.core_type = #tpu.core_type<tc>, window_params = [{transform_indices = @transform_0, window_bounds = array<i64: 1, 18, 18, 8>}, {transform_indices = @transform_1, window_bounds = array<i64: 1, 10, 10, 8>}, {pipeline_mode = #tpu.pipeline_mode<synchronous>, transform_indices = @transform_2, window_bounds = array<i64: 8, 72>}, {pipeline_mode = #tpu.pipeline_mode<synchronous>, transform_indices = @transform_3, window_bounds = array<i64: 8, 1>}, {transform_indices = @transform_4, window_bounds = array<i64: 1, 8, 256>}]} {
    %c16_i32 = arith.constant 16 : i32
    %0 = arith.muli %arg1, %c16_i32 : i32
    %c0 = arith.constant 0 : index
    %1 = arith.index_cast %0 : i32 to index
    %c0_0 = arith.constant 0 : index
    %c0_1 = arith.constant 0 : index
    %2 = vector.load %arg2[%c0, %1, %c0_0, %c0_1] : memref<1x18x18x8xbf16, #tpu.memory_space<vmem>>, vector<1x18x18x8xbf16>
    %3 = vector.shape_cast %2 : vector<1x18x18x8xbf16> to vector<18x18x8xbf16>
    %c8_i32 = arith.constant 8 : i32
    %4 = arith.muli %arg1, %c8_i32 : i32
    %c0_2 = arith.constant 0 : index
    %5 = arith.index_cast %4 : i32 to index
    %c0_3 = arith.constant 0 : index
    %c0_4 = arith.constant 0 : index
    %6 = vector.load %arg3[%c0_2, %5, %c0_3, %c0_4] : memref<1x10x10x8xbf16, #tpu.memory_space<vmem>>, vector<1x10x10x8xbf16>
    %7 = vector.shape_cast %6 : vector<1x10x10x8xbf16> to vector<10x10x8xbf16>
    %8 = vector.extract_strided_slice %7 {offsets = [1, 0, 0], sizes = [8, 10, 8], strides = [1, 1, 1]} : vector<10x10x8xbf16> to vector<8x10x8xbf16>
    %9 = vector.shape_cast %8 : vector<8x10x8xbf16> to vector<8x1x10x8xbf16>
    %10 = vector.shape_cast %9 : vector<8x1x10x8xbf16> to vector<8x1x10x8xbf16>
    %11 = vector.broadcast %10 : vector<8x1x10x8xbf16> to vector<8x2x10x8xbf16>
    %12 = vector.shape_cast %11 : vector<8x2x10x8xbf16> to vector<16x10x8xbf16>
    %13 = vector.extract_strided_slice %7 {offsets = [0, 0, 0], sizes = [1, 10, 8], strides = [1, 1, 1]} : vector<10x10x8xbf16> to vector<1x10x8xbf16>
    %14 = vector.extract_strided_slice %7 {offsets = [9, 0, 0], sizes = [1, 10, 8], strides = [1, 1, 1]} : vector<10x10x8xbf16> to vector<1x10x8xbf16>
    %15 = tpu.concatenate %13, %12, %14 in 0 : vector<1x10x8xbf16>, vector<16x10x8xbf16>, vector<1x10x8xbf16> -> vector<18x10x8xbf16>
    %16 = vector.shape_cast %15 : vector<18x10x8xbf16> to vector<18x10x1x8xbf16>
    %17 = vector.shape_cast %16 : vector<18x10x1x8xbf16> to vector<18x10x1x8xbf16>
    %18 = vector.broadcast %17 : vector<18x10x1x8xbf16> to vector<18x10x2x8xbf16>
    %19 = vector.shape_cast %18 : vector<18x10x2x8xbf16> to vector<18x20x8xbf16>
    %20 = vector.extract_strided_slice %19 {offsets = [0, 1, 0], sizes = [18, 18, 8], strides = [1, 1, 1]} : vector<18x20x8xbf16> to vector<18x18x8xbf16>
    %21 = arith.extf %3 : vector<18x18x8xbf16> to vector<18x18x8xf32>
    %22 = arith.extf %20 : vector<18x18x8xbf16> to vector<18x18x8xf32>
    %23 = arith.addf %21, %22 : vector<18x18x8xf32>
    %24 = arith.truncf %23 : vector<18x18x8xf32> to vector<18x18x8xbf16>
    %25 = vector.extract_strided_slice %24 {offsets = [0, 0, 0], sizes = [18, 16, 8], strides = [1, 1, 1]} : vector<18x18x8xbf16> to vector<18x16x8xbf16>
    %26 = vector.extract_strided_slice %24 {offsets = [0, 1, 0], sizes = [18, 16, 8], strides = [1, 1, 1]} : vector<18x18x8xbf16> to vector<18x16x8xbf16>
    %27 = vector.extract_strided_slice %24 {offsets = [0, 2, 0], sizes = [18, 16, 8], strides = [1, 1, 1]} : vector<18x18x8xbf16> to vector<18x16x8xbf16>
    %28 = tpu.concatenate %25, %26, %27 in 2 : vector<18x16x8xbf16>, vector<18x16x8xbf16>, vector<18x16x8xbf16> -> vector<18x16x24xbf16>
    %29 = vector.shape_cast %28 : vector<18x16x24xbf16> to vector<288x24xbf16>
    %30 = vector.extract_strided_slice %29 {offsets = [0, 0], sizes = [256, 24], strides = [1, 1]} : vector<288x24xbf16> to vector<256x24xbf16>
    %31 = vector.extract_strided_slice %29 {offsets = [16, 0], sizes = [256, 24], strides = [1, 1]} : vector<288x24xbf16> to vector<256x24xbf16>
    %32 = vector.extract_strided_slice %29 {offsets = [32, 0], sizes = [256, 24], strides = [1, 1]} : vector<288x24xbf16> to vector<256x24xbf16>
    %33 = tpu.concatenate %30, %31, %32 in 1 : vector<256x24xbf16>, vector<256x24xbf16>, vector<256x24xbf16> -> vector<256x72xbf16>
    %c0_5 = arith.constant 0 : index
    %c0_6 = arith.constant 0 : index
    %34 = vector.load %arg4[%c0_5, %c0_6] : memref<8x72xbf16, #tpu.memory_space<vmem>>, vector<8x72xbf16>
    %cst = arith.constant dense<0.000000e+00> : vector<8x256xf32>
    %35 = tpu.matmul %34, %33, %cst {dimension_numbers = #tpu.dot_dimension_numbers<[1], [1], [0], [0], [0, 0, 1, 0], [], []>} : vector<8x72xbf16>, vector<256x72xbf16>, vector<8x256xf32> -> vector<8x256xf32>
    %c0_7 = arith.constant 0 : index
    %c0_8 = arith.constant 0 : index
    %36 = vector.load %arg5[%c0_7, %c0_8] : memref<8x1xf32, #tpu.memory_space<vmem>>, vector<8x1xf32>
    %37 = vector.broadcast %36 : vector<8x1xf32> to vector<8x256xf32>
    %38 = arith.addf %35, %37 : vector<8x256xf32>
    %cst_9 = arith.constant 0.000000e+00 : f32
    %39 = vector.broadcast %cst_9 : f32 to vector<8x256xf32>
    %40 = arith.maximumf %38, %39 : vector<8x256xf32>
    %c0_10 = arith.constant 0 : index
    %c0_11 = arith.constant 0 : index
    %c0_12 = arith.constant 0 : index
    %41 = vector.load %arg6[%c0_10, %c0_11, %c0_12] : memref<1x8x256xf32, #tpu.memory_space<vmem>>, vector<1x8x256xf32>
    %42 = vector.shape_cast %41 : vector<1x8x256xf32> to vector<8x256xf32>
    %43 = vector.shape_cast %40 : vector<8x256xf32> to vector<1x8x256xf32>
    tpu.vector_store %arg6[%c0_10, %c0_11, %c0_12], %43 {strides = array<i32>} : memref<1x8x256xf32, #tpu.memory_space<vmem>>, vector<1x8x256xf32>,
    return
  }
  func.func @transform_0(%arg0: i32, %arg1: i32) -> (i32, i32, i32, i32) {
    %c0_i32 = arith.constant 0 : i32
    %c0_i32_0 = arith.constant 0 : i32
    %c0_i32_1 = arith.constant 0 : i32
    %c0_i32_2 = arith.constant 0 : i32
    return %arg0, %c0_i32, %c0_i32_0, %c0_i32_1 : i32, i32, i32, i32
  }
  func.func @transform_1(%arg0: i32, %arg1: i32) -> (i32, i32, i32, i32) {
    %c0_i32 = arith.constant 0 : i32
    %c0_i32_0 = arith.constant 0 : i32
    %c0_i32_1 = arith.constant 0 : i32
    %c0_i32_2 = arith.constant 0 : i32
    return %arg0, %c0_i32, %c0_i32_0, %c0_i32_1 : i32, i32, i32, i32
  }
  func.func @transform_2(%arg0: i32, %arg1: i32) -> (i32, i32) {
    %c0_i32 = arith.constant 0 : i32
    %c0_i32_0 = arith.constant 0 : i32
    %c0_i32_1 = arith.constant 0 : i32
    return %c0_i32, %c0_i32_0 : i32, i32
  }
  func.func @transform_3(%arg0: i32, %arg1: i32) -> (i32, i32) {
    %c0_i32 = arith.constant 0 : i32
    %c0_i32_0 = arith.constant 0 : i32
    %c0_i32_1 = arith.constant 0 : i32
    return %c0_i32, %c0_i32_0 : i32, i32
  }
  func.func @transform_4(%arg0: i32, %arg1: i32) -> (i32, i32, i32) {
    %c0_i32 = arith.constant 0 : i32
    %c0_i32_0 = arith.constant 0 : i32
    return %arg0, %c0_i32, %arg1 : i32, i32, i32
  }
}

</mosaic_0001>

<llo_original>
// kernel: tpu_custom_call.1
$region0: #{tpu_custom_call.1}
  #allocation0 [shape = 'u32[]', space=smem, size = 0x4, offset = 0x4, fixed_abs, tag = 'smem constant byte address 0x4 - core index']
  #allocation1 [shape = 'u32[144,128]{1,0:T(1,128)}', space=vmem, size = 0x12000, scoped, tag = 'internal scratch']
  %s0 = inlined_call_operand.vmem [shape: bf16[2,18,18,8], index: 0, kind: input, shape index: {}]
  %s1 = inlined_call_operand.vmem [shape: bf16[2,10,10,8], index: 1, kind: input, shape index: {}]
  %s2 = inlined_call_operand.vmem [shape: bf16[8,72], index: 2, kind: input, shape index: {}]
  %s3 = inlined_call_operand.vmem [shape: f32[8,1], index: 3, kind: input, shape index: {}]
  %s4 = inlined_call_operand.hbm [shape: f32[2,8,256], index: 4, kind: output, shape index: {}]
  %s5 = sld [smem:[#allocation0]]
  $region49: #{tpu_custom_call.1} parent=0
    _
  %s7 = ssub.s32 1, %s5
  %s8 = scalar_select 0, %s7, %s5
  $region1: #{tpu_custom_call.1} parent=0
    #allocation2 [shape = 'u8[16384]{0}', space=vmem, size = 0x4000, scoped, tag = 'output window, operand 0']
    #allocation3 [shape = 's32[2]{0}', space=sflag, size = 0x8, scoped, tag = 'scoped memory for tpu_custom_call.1']
    %9 = vsyncpa [#allocation3], 0
    %s10 = scalar_lea.sflag [#allocation3], 1
    %11 = vsyncpa %s10, 0
    loop: start=0, step=1, limit=4
    $region2: #{tpu_custom_call.1} parent=1 // loop_pre_header
      _
    $region3: #{tpu_custom_call.1} parent=1 // loop_header
      %s13 = sphi 0, %s17
      %p14 = scmp.ge.s32.totalorder %s13, 4
      %s20 = sphi 0, %s32
      %s21 = sphi 0, %s28
      %s22 = sphi 0, %s20
      %s23 = sphi 0, %s21
      %s24 = sphi 0, %s22
      %s25 = sphi 0, %s23
      %s35 = sphi 0, %s37
      %s38 = sphi 0, %s35
      %s39 = sphi 0, %s38
      %s55 = sphi 0, %s39
      %s61 = sphi 0, %s63
      %s64 = sphi 0, %s61
      %s65 = sphi 0, %s64
      %s81 = sphi 0, %s65
      %s85 = sphi 0, %s85
      %s87 = sphi 0, %s85
      %s88 = sphi 0, %s87
      %s102 = sphi 0, %s88
      %s106 = sphi 0, %s106
      %s108 = sphi 0, %s106
      %s109 = sphi 0, %s108
      %s123 = sphi 0, %s109
      %s131 = sphi 0, %s133
      %s134 = sphi 0, %s131
      %s135 = sphi 0, %s134
      %s151 = sphi 0, %s135
    $region4: #{tpu_custom_call.1} parent=1 // loop_header_branch
      %16 = sbr.rel (%p14) target = $region8
    $region5: #{tpu_custom_call.1} parent=1 // loop_body
      %s18 = ssub.s32 %s13, 1
      %s19 = ssub.s32 %s13, 2
      %s26 = sadd.s32 1, %s21
      %p27 = scmp.ge.s32.totalorder %s26, 1
      %s28 = scalar_select %p27, 0, %s26
      %s29 = sadd.s32 1, %s20
      %s30 = scalar_select %p27, %s29, %s20
      %p31 = scmp.ge.s32.totalorder %s30, 2
      %s32 = scalar_select %p31, 0, %s30
      %s33 = ssub.s32 %s20, %s32
      %p34 = scmp.eq.s32.totalorder %s33, 0
      %s36 = sadd.s32 %s35, 1
      %s37 = scalar_select %p34, %s35, %s36
      %p40 = pneg %p34
      %p41 = scmp.eq.s32.totalorder %s13, 1
      %p42 = por %p40, %p41
      %p43 = scmp.ne.s32.totalorder %s35, %s38
      %p44 = scmp.eq.s32.totalorder %s13, 0
      %p45 = por %p43, %p44
      %p46 = scmp.ne.s32.totalorder %s35, %s38
      %p47 = scmp.eq.s32.totalorder %s18, 1
      %p48 = por %p46, %p47
      %p49 = scmp.ne.s32.totalorder %s38, %s39
      %p50 = scmp.eq.s32.totalorder %s18, 0
      %p51 = por %p49, %p50
      %p52 = scmp.ne.s32.totalorder %s38, %s39
      %p53 = scmp.eq.s32.totalorder %s19, 1
      %p54 = por %p52, %p53
      %p56 = scmp.ne.s32.totalorder %s39, %s55
      %p57 = scmp.eq.s32.totalorder %s19, 0
      %p58 = por %p56, %p57
      %s59 = ssub.s32 %s20, %s32
      %p60 = scmp.eq.s32.totalorder %s59, 0
      %s62 = sadd.s32 %s61, 1
      %s63 = scalar_select %p60, %s61, %s62
      %p66 = pneg %p60
      %p67 = scmp.eq.s32.totalorder %s13, 1
      %p68 = por %p66, %p67
      %p69 = scmp.ne.s32.totalorder %s61, %s64
      %p70 = scmp.eq.s32.totalorder %s13, 0
      %p71 = por %p69, %p70
      %p72 = scmp.ne.s32.totalorder %s61, %s64
      %p73 = scmp.eq.s32.totalorder %s18, 1
      %p74 = por %p72, %p73
      %p75 = scmp.ne.s32.totalorder %s64, %s65
      %p76 = scmp.eq.s32.totalorder %s18, 0
      %p77 = por %p75, %p76
      %p78 = scmp.ne.s32.totalorder %s64, %s65
      %p79 = scmp.eq.s32.totalorder %s19, 1
      %p80 = por %p78, %p79
      %p82 = scmp.ne.s32.totalorder %s65, %s81
      %p83 = scmp.eq.s32.totalorder %s19, 0
      %p84 = por %p82, %p83
      %s86 = sadd.s32 %s85, 1
      %p89 = scmp.eq.s32.totalorder %s13, 1
      %p90 = scmp.ne.s32.totalorder %s85, %s87
      %p91 = scmp.eq.s32.totalorder %s13, 0
      %p92 = por %p90, %p91
      %p93 = scmp.ne.s32.totalorder %s85, %s87
      %p94 = scmp.eq.s32.totalorder %s18, 1
      %p95 = por %p93, %p94
      %p96 = scmp.ne.s32.totalorder %s87, %s88
      %p97 = scmp.eq.s32.totalorder %s18, 0
      %p98 = por %p96, %p97
      %p99 = scmp.ne.s32.totalorder %s87, %s88
      %p100 = scmp.eq.s32.totalorder %s19, 1
      %p101 = por %p99, %p100
      %p103 = scmp.ne.s32.totalorder %s88, %s102
      %p104 = scmp.eq.s32.totalorder %s19, 0
      %p105 = por %p103, %p104
      %s107 = sadd.s32 %s106, 1
      %p110 = scmp.eq.s32.totalorder %s13, 1
      %p111 = scmp.ne.s32.totalorder %s106, %s108
      %p112 = scmp.eq.s32.totalorder %s13, 0
      %p113 = por %p111, %p112
      %p114 = scmp.ne.s32.totalorder %s106, %s108
      %p115 = scmp.eq.s32.totalorder %s18, 1
      %p116 = por %p114, %p115
      %p117 = scmp.ne.s32.totalorder %s108, %s109
      %p118 = scmp.eq.s32.totalorder %s18, 0
      %p119 = por %p117, %p118
      %p120 = scmp.ne.s32.totalorder %s108, %s109
      %p121 = scmp.eq.s32.totalorder %s19, 1
      %p122 = por %p120, %p121
      %p124 = scmp.ne.s32.totalorder %s109, %s123
      %p125 = scmp.eq.s32.totalorder %s19, 0
      %p126 = por %p124, %p125
      %s127 = ssub.s32 %s20, %s32
      %s128 = ssub.s32 %s21, %s28
      %s129 = sor.u32 %s127, %s128
      %p130 = scmp.eq.s32.totalorder %s129, 0
      %s132 = sadd.s32 %s131, 1
      %s133 = scalar_select %p130, %s131, %s132
      %p136 = pneg %p130
      %p137 = scmp.eq.s32.totalorder %s13, 1
      %p138 = por %p136, %p137
      %p139 = scmp.ne.s32.totalorder %s131, %s134
      %p140 = scmp.eq.s32.totalorder %s13, 0
      %p141 = por %p139, %p140
      %p142 = scmp.ne.s32.totalorder %s131, %s134
      %p143 = scmp.eq.s32.totalorder %s18, 1
      %p144 = por %p142, %p143
      %p145 = scmp.ne.s32.totalorder %s134, %s135
      %p146 = scmp.eq.s32.totalorder %s18, 0
      %p147 = por %p145, %p146
      %p148 = scmp.ne.s32.totalorder %s134, %s135
      %p149 = scmp.eq.s32.totalorder %s19, 1
      %p150 = por %p148, %p149
      %p152 = scmp.ne.s32.totalorder %s135, %s151
      %p153 = scmp.eq.s32.totalorder %s19, 0
      %p154 = por %p152, %p153
      %p155 = scmp.le.s32.totalorder 1, %s13
      %p156 = scmp.lt.s32.totalorder %s13, 3
      %p157 = pnand %p155, %p156
      %p158 = pneg %p157
      // Predicated region
      $region9: #{tpu_custom_call.1} parent=5 // pred_check
        _
      $region10: #{tpu_custom_call.1} parent=5 // pred_check_branch
        %160 = sbr.rel (%p157) target = $region12
      $region11: #{tpu_custom_call.1} parent=5 // pred_region
        %s161 = ssub.s32 %s13, 1
        // Predicated region
        $region13: #{tpu_custom_call.1} parent=11 // pred_check
          %p162 = pneg %p98
        $region14: #{tpu_custom_call.1} parent=11 // pred_check_branch
          %164 = sbr.rel (%p162) target = $region16
        $region15: #{tpu_custom_call.1} parent=11 // pred_region
          _
        $region16: #{tpu_custom_call.1} parent=11 // pred_fallthru
          _
        // Predicated region
        $region17: #{tpu_custom_call.1} parent=11 // pred_check
          %p165 = pneg %p119
        $region18: #{tpu_custom_call.1} parent=11 // pred_check_branch
          %167 = sbr.rel (%p165) target = $region20
        $region19: #{tpu_custom_call.1} parent=11 // pred_region
          _
        $region20: #{tpu_custom_call.1} parent=11 // pred_fallthru
          _
      $region12: #{tpu_custom_call.1} parent=5 // pred_fallthru
        _
      %p168 = scmp.lt.s32.totalorder %s13, 2
      // Predicated region
      $region21: #{tpu_custom_call.1} parent=5 // pred_check
        %p169 = pneg %p168
      $region22: #{tpu_custom_call.1} parent=5 // pred_check_branch
        %171 = sbr.rel (%p169) target = $region24
      $region23: #{tpu_custom_call.1} parent=5 // pred_region
        // Predicated region
        $region25: #{tpu_custom_call.1} parent=23 // pred_check
          %p172 = pneg %p45
        $region26: #{tpu_custom_call.1} parent=23 // pred_check_branch
          %174 = sbr.rel (%p172) target = $region28
        $region27: #{tpu_custom_call.1} parent=23 // pred_region
          %p175 = scmp.lt.s32.totalorder %s20, 1
          %s176 = scalar_select %p175, %s20, 1
          %s177 = smul.addr %s176, 54
          %s178 = smul.addr %s177, 4
          %s179 = scalar_lea.vmem %s0, %s178
        $region28: #{tpu_custom_call.1} parent=23 // pred_fallthru
          _
        // Predicated region
        $region29: #{tpu_custom_call.1} parent=23 // pred_check
          %p180 = pneg %p71
        $region30: #{tpu_custom_call.1} parent=23 // pred_check_branch
          %182 = sbr.rel (%p180) target = $region32
        $region31: #{tpu_custom_call.1} parent=23 // pred_region
          %p183 = scmp.lt.s32.totalorder %s20, 1
          %s184 = scalar_select %p183, %s20, 1
          %s185 = smul.addr %s184, 20
          %s186 = smul.addr %s185, 4
          %s187 = scalar_lea.vmem %s1, %s186
        $region32: #{tpu_custom_call.1} parent=23 // pred_fallthru
          _
      $region24: #{tpu_custom_call.1} parent=5 // pred_fallthru
        _
      %p188 = scmp.le.s32.totalorder 1, %s13
      %p189 = scmp.lt.s32.totalorder %s13, 3
      %p190 = pnand %p188, %p189
      %p191 = pneg %p190
      // Predicated region
      $region33: #{tpu_custom_call.1} parent=5 // pred_check
        _
      $region34: #{tpu_custom_call.1} parent=5 // pred_check_branch
        %193 = sbr.rel (%p190) target = $region36
      $region35: #{tpu_custom_call.1} parent=5 // pred_region
        %s194 = ssub.s32 %s13, 1
        %p195 = scmp.lt.s32.totalorder %s22, 1
        %s196 = scalar_select %p195, %s22, 1
        %s197 = smul.addr %s196, 54
        %s198 = smul.addr %s197, 4
        %s199 = scalar_lea.vmem %s0, %s198
        %p200 = pneg %p51
        %p201 = pneg %p48
        %p202 = scmp.lt.s32.totalorder %s22, 1
        %s203 = scalar_select %p202, %s22, 1
        %s204 = smul.addr %s203, 20
        %s205 = smul.addr %s204, 4
        %s206 = scalar_lea.vmem %s1, %s205
        %p207 = pneg %p77
        %p208 = pneg %p74
        %p209 = pneg %p98
        %p210 = pneg %p95
        %p211 = pneg %p119
        %p212 = pneg %p116
        %p213 = pneg %p147
        %p214 = pneg %p144
        %s215 = sand.u32 %s134, 1
        %s216 = scalar_lea.sflag [#allocation3], %s215
        %s217 = sand.u32 %s134, 1
        %s218 = smul.addr %s217, 16
        %s219 = scalar_lea.vmem [#allocation2], %s218
        %p220 = scmp.lt.s32.totalorder %s22, 1
        %s221 = scalar_select %p220, %s22, 1
        %s222 = smul.addr %s221, 54
        %s223 = smul.addr %s222, 4
        %s224 = scalar_lea.vmem %s0, %s223
        %p225 = scmp.lt.s32.totalorder %s22, 1
        %s226 = scalar_select %p225, %s22, 1
        %s227 = smul.addr %s226, 20
        %s228 = smul.addr %s227, 4
        %s229 = scalar_lea.vmem %s1, %s228
        %s230 = smul.u32 2, %s23
        %s232 = smul.u32 %s23, 16
        %s233 = smul.u32 %s232, 3
        %s234 = smul.addr %s233, 4
        %s235 = scalar_lea.vmem %s224, %s234
        %v236 = vld [vmem:[%s235] sm:$0xf]
        %v237 = vld [vmem:[%s235 + $0x4] sm:$0xf]
        %v238 = vld [vmem:[%s235 + $0x8] sm:$0x1]
        %v239 = vld [vmem:[%s235 + $0xc] sm:$0xf]
        %v240 = vld [vmem:[%s235 + $0x10] sm:$0xf]
        %v241 = vld [vmem:[%s235 + $0x14] sm:$0x1]
        %v242 = vld [vmem:[%s235 + $0x18] sm:$0xf]
        %v243 = vld [vmem:[%s235 + $0x1c] sm:$0xf]
        %v244 = vld [vmem:[%s235 + $0x20] sm:$0x1]
        %v245 = vld [vmem:[%s235 + $0x24] sm:$0xf]
        %v246 = vld [vmem:[%s235 + $0x28] sm:$0xf]
        %v247 = vld [vmem:[%s235 + $0x2c] sm:$0x1]
        %v248 = vld [vmem:[%s235 + $0x30] sm:$0xf]
        %v249 = vld [vmem:[%s235 + $0x34] sm:$0xf]
        %v250 = vld [vmem:[%s235 + $0x38] sm:$0x1]
        %v251 = vld [vmem:[%s235 + $0x3c] sm:$0xf]
        %v252 = vld [vmem:[%s235 + $0x40] sm:$0xf]
        %v253 = vld [vmem:[%s235 + $0x44] sm:$0x1]
        %v254 = vld [vmem:[%s235 + $0x48] sm:$0xf]
        %v255 = vld [vmem:[%s235 + $0x4c] sm:$0xf]
        %v256 = vld [vmem:[%s235 + $0x50] sm:$0x1]
        %v257 = vld [vmem:[%s235 + $0x54] sm:$0xf]
        %v258 = vld [vmem:[%s235 + $0x58] sm:$0xf]
        %v259 = vld [vmem:[%s235 + $0x5c] sm:$0x1]
        %v260 = vld [vmem:[%s235 + $0x60] sm:$0xf]
        %v261 = vld [vmem:[%s235 + $0x64] sm:$0xf]
        %v262 = vld [vmem:[%s235 + $0x68] sm:$0x1]
        %v263 = vld [vmem:[%s235 + $0x6c] sm:$0xf]
        %v264 = vld [vmem:[%s235 + $0x70] sm:$0xf]
        %v265 = vld [vmem:[%s235 + $0x74] sm:$0x1]
        %v266 = vld [vmem:[%s235 + $0x78] sm:$0xf]
        %v267 = vld [vmem:[%s235 + $0x7c] sm:$0xf]
        %v268 = vld [vmem:[%s235 + $0x80] sm:$0x1]
        %v269 = vld [vmem:[%s235 + $0x84] sm:$0xf]
        %v270 = vld [vmem:[%s235 + $0x88] sm:$0xf]
        %v271 = vld [vmem:[%s235 + $0x8c] sm:$0x1]
        %v272 = vld [vmem:[%s235 + $0x90] sm:$0xf]
        %v273 = vld [vmem:[%s235 + $0x94] sm:$0xf]
        %v274 = vld [vmem:[%s235 + $0x98] sm:$0x1]
        %v275 = vld [vmem:[%s235 + $0x9c] sm:$0xf]
        %v276 = vld [vmem:[%s235 + $0xa0] sm:$0xf]
        %v277 = vld [vmem:[%s235 + $0xa4] sm:$0x1]
        %v278 = vld [vmem:[%s235 + $0xa8] sm:$0xf]
        %v279 = vld [vmem:[%s235 + $0xac] sm:$0xf]
        %v280 = vld [vmem:[%s235 + $0xb0] sm:$0x1]
        %v281 = vld [vmem:[%s235 + $0xb4] sm:$0xf]
        %v282 = vld [vmem:[%s235 + $0xb8] sm:$0xf]
        %v283 = vld [vmem:[%s235 + $0xbc] sm:$0x1]
        %v284 = vld [vmem:[%s235 + $0xc0] sm:$0xf]
        %v285 = vld [vmem:[%s235 + $0xc4] sm:$0xf]
        %v286 = vld [vmem:[%s235 + $0xc8] sm:$0x1]
        %v287 = vld [vmem:[%s235 + $0xcc] sm:$0xf]
        %v288 = vld [vmem:[%s235 + $0xd0] sm:$0xf]
        %v289 = vld [vmem:[%s235 + $0xd4] sm:$0x1]
        %s290 = smul.u32 %s23, 8
        %s291 = smul.u32 %s290, 2
        %s292 = smul.addr %s291, 4
        %s293 = scalar_lea.vmem %s229, %s292
        %v294 = vld [vmem:[%s293] sm:$0xf]
        %v295 = vld [vmem:[%s293 + $0x4] sm:$0x1]
        %v296 = vld [vmem:[%s293 + $0x8] sm:$0xf]
        %v297 = vld [vmem:[%s293 + $0xc] sm:$0x1]
        %v298 = vld [vmem:[%s293 + $0x10] sm:$0xf]
        %v299 = vld [vmem:[%s293 + $0x14] sm:$0x1]
        %v300 = vld [vmem:[%s293 + $0x18] sm:$0xf]
        %v301 = vld [vmem:[%s293 + $0x1c] sm:$0x1]
        %v302 = vld [vmem:[%s293 + $0x20] sm:$0xf]
        %v303 = vld [vmem:[%s293 + $0x24] sm:$0x1]
        %v304 = vld [vmem:[%s293 + $0x28] sm:$0xf]
        %v305 = vld [vmem:[%s293 + $0x2c] sm:$0x1]
        %v306 = vld [vmem:[%s293 + $0x30] sm:$0xf]
        %v307 = vld [vmem:[%s293 + $0x34] sm:$0x1]
        %v308 = vld [vmem:[%s293 + $0x38] sm:$0xf]
        %v309 = vld [vmem:[%s293 + $0x3c] sm:$0x1]
        %v310 = vld [vmem:[%s293 + $0x40] sm:$0xf]
        %v311 = vld [vmem:[%s293 + $0x44] sm:$0x1]
        %v312 = vld [vmem:[%s293 + $0x48] sm:$0xf]
        %v313 = vld [vmem:[%s293 + $0x4c] sm:$0x1]
        %v335 = vunpack.c.l.s4 1966171168
        %v336 = vunpack.c.0.s8 %v335
        %v337 = vlaneseq
        %v338 = vshrl.u32 %v337, 7
        %v339 = vsub.s32 %v336, %v338
        %v340 = vrot.slane %v294, %v339
        %v341 = vcombine.high %v340, %v340
        %v343 = vunpack.c.l.s4 1966171168
        %v344 = vunpack.c.0.s8 %v343
        %v345 = vlaneseq
        %v346 = vshrl.u32 %v345, 7
        %v347 = vsub.s32 %v344, %v346
        %v348 = vrot.slane %v340, %v347
        %v350 = vunpack.c.l.s4 1966171168
        %v351 = vunpack.c.0.s8 %v350
        %v352 = vlaneseq
        %v353 = vshrl.u32 %v352, 7
        %v354 = vsub.s32 %v351, %v353
        %v355 = vrot.slane %v341, %v354
        %v356 = vcombine.high %v348, %v348
        %v357 = vcombine.high %v355, %v355
        %v359 = vunpack.c.l.s4 1966171168
        %v360 = vunpack.c.0.s8 %v359
        %v361 = vlaneseq
        %v362 = vshrl.u32 %v361, 7
        %v363 = vsub.s32 %v360, %v362
        %v364 = vrot.slane %v295, %v363
        %v366 = vunpack.c.l.s4 1966171168
        %v367 = vunpack.c.0.s8 %v366
        %v368 = vlaneseq
        %v369 = vshrl.u32 %v368, 7
        %v370 = vsub.s32 %v367, %v369
        %v371 = vrot.slane %v364, %v370
        %v373 = vunpack.c.l.s4 1966171168
        %v374 = vunpack.c.0.s8 %v373
        %v375 = vlaneseq
        %v376 = vshrl.u32 %v375, 7
        %v377 = vsub.s32 %v374, %v376
        %v378 = vrot.slane %v296, %v377
        %v379 = vcombine.high %v378, %v378
        %v381 = vunpack.c.l.s4 1966171168
        %v382 = vunpack.c.0.s8 %v381
        %v383 = vlaneseq
        %v384 = vshrl.u32 %v383, 7
        %v385 = vsub.s32 %v382, %v384
        %v386 = vrot.slane %v378, %v385
        %v388 = vunpack.c.l.s4 1966171168
        %v389 = vunpack.c.0.s8 %v388
        %v390 = vlaneseq
        %v391 = vshrl.u32 %v390, 7
        %v392 = vsub.s32 %v389, %v391
        %v393 = vrot.slane %v379, %v392
        %v394 = vcombine.high %v386, %v386
        %v395 = vcombine.high %v393, %v393
        %v397 = vunpack.c.l.s4 1966171168
        %v398 = vunpack.c.0.s8 %v397
        %v399 = vlaneseq
        %v400 = vshrl.u32 %v399, 7
        %v401 = vsub.s32 %v398, %v400
        %v402 = vrot.slane %v297, %v401
        %v404 = vunpack.c.l.s4 1966171168
        %v405 = vunpack.c.0.s8 %v404
        %v406 = vlaneseq
        %v407 = vshrl.u32 %v406, 7
        %v408 = vsub.s32 %v405, %v407
        %v409 = vrot.slane %v402, %v408
        %v411 = vunpack.c.l.s4 1966171168
        %v412 = vunpack.c.0.s8 %v411
        %v413 = vlaneseq
        %v414 = vshrl.u32 %v413, 7
        %v415 = vsub.s32 %v412, %v414
        %v416 = vrot.slane %v298, %v415
        %v417 = vcombine.high %v416, %v416
        %v419 = vunpack.c.l.s4 1966171168
        %v420 = vunpack.c.0.s8 %v419
        %v421 = vlaneseq
        %v422 = vshrl.u32 %v421, 7
        %v423 = vsub.s32 %v420, %v422
        %v424 = vrot.slane %v416, %v423
        %v426 = vunpack.c.l.s4 1966171168
        %v427 = vunpack.c.0.s8 %v426
        %v428 = vlaneseq
        %v429 = vshrl.u32 %v428, 7
        %v430 = vsub.s32 %v427, %v429
        %v431 = vrot.slane %v417, %v430
        %v432 = vcombine.high %v424, %v424
        %v433 = vcombine.high %v431, %v431
        %v435 = vunpack.c.l.s4 1966171168
        %v436 = vunpack.c.0.s8 %v435
        %v437 = vlaneseq
        %v438 = vshrl.u32 %v437, 7
        %v439 = vsub.s32 %v436, %v438
        %v440 = vrot.slane %v299, %v439
        %v442 = vunpack.c.l.s4 1966171168
        %v443 = vunpack.c.0.s8 %v442
        %v444 = vlaneseq
        %v445 = vshrl.u32 %v444, 7
        %v446 = vsub.s32 %v443, %v445
        %v447 = vrot.slane %v440, %v446
        %v449 = vunpack.c.l.s4 1966171168
        %v450 = vunpack.c.0.s8 %v449
        %v451 = vlaneseq
        %v452 = vshrl.u32 %v451, 7
        %v453 = vsub.s32 %v450, %v452
        %v454 = vrot.slane %v300, %v453
        %v455 = vcombine.high %v454, %v454
        %v457 = vunpack.c.l.s4 1966171168
        %v458 = vunpack.c.0.s8 %v457
        %v459 = vlaneseq
        %v460 = vshrl.u32 %v459, 7
        %v461 = vsub.s32 %v458, %v460
        %v462 = vrot.slane %v454, %v461
        %v464 = vunpack.c.l.s4 1966171168
        %v465 = vunpack.c.0.s8 %v464
        %v466 = vlaneseq
        %v467 = vshrl.u32 %v466, 7
        %v468 = vsub.s32 %v465, %v467
        %v469 = vrot.slane %v455, %v468
        %v470 = vcombine.high %v462, %v462
        %v471 = vcombine.high %v469, %v469
        %v473 = vunpack.c.l.s4 1966171168
        %v474 = vunpack.c.0.s8 %v473
        %v475 = vlaneseq
        %v476 = vshrl.u32 %v475, 7
        %v477 = vsub.s32 %v474, %v476
        %v478 = vrot.slane %v301, %v477
        %v480 = vunpack.c.l.s4 1966171168
        %v481 = vunpack.c.0.s8 %v480
        %v482 = vlaneseq
        %v483 = vshrl.u32 %v482, 7
        %v484 = vsub.s32 %v481, %v483
        %v485 = vrot.slane %v478, %v484
        %v487 = vunpack.c.l.s4 1966171168
        %v488 = vunpack.c.0.s8 %v487
        %v489 = vlaneseq
        %v490 = vshrl.u32 %v489, 7
        %v491 = vsub.s32 %v488, %v490
        %v492 = vrot.slane %v302, %v491
        %v493 = vcombine.high %v492, %v492
        %v495 = vunpack.c.l.s4 1966171168
        %v496 = vunpack.c.0.s8 %v495
        %v497 = vlaneseq
        %v498 = vshrl.u32 %v497, 7
        %v499 = vsub.s32 %v496, %v498
        %v500 = vrot.slane %v492, %v499
        %v502 = vunpack.c.l.s4 1966171168
        %v503 = vunpack.c.0.s8 %v502
        %v504 = vlaneseq
        %v505 = vshrl.u32 %v504, 7
        %v506 = vsub.s32 %v503, %v505
        %v507 = vrot.slane %v493, %v506
        %v508 = vcombine.high %v500, %v500
        %v509 = vcombine.high %v507, %v507
        %v511 = vunpack.c.l.s4 1966171168
        %v512 = vunpack.c.0.s8 %v511
        %v513 = vlaneseq
        %v514 = vshrl.u32 %v513, 7
        %v515 = vsub.s32 %v512, %v514
        %v516 = vrot.slane %v303, %v515
        %v518 = vunpack.c.l.s4 1966171168
        %v519 = vunpack.c.0.s8 %v518
        %v520 = vlaneseq
        %v521 = vshrl.u32 %v520, 7
        %v522 = vsub.s32 %v519, %v521
        %v523 = vrot.slane %v516, %v522
        %v525 = vunpack.c.l.s4 1966171168
        %v526 = vunpack.c.0.s8 %v525
        %v527 = vlaneseq
        %v528 = vshrl.u32 %v527, 7
        %v529 = vsub.s32 %v526, %v528
        %v530 = vrot.slane %v304, %v529
        %v531 = vcombine.high %v530, %v530
        %v533 = vunpack.c.l.s4 1966171168
        %v534 = vunpack.c.0.s8 %v533
        %v535 = vlaneseq
        %v536 = vshrl.u32 %v535, 7
        %v537 = vsub.s32 %v534, %v536
        %v538 = vrot.slane %v530, %v537
        %v540 = vunpack.c.l.s4 1966171168
        %v541 = vunpack.c.0.s8 %v540
        %v542 = vlaneseq
        %v543 = vshrl.u32 %v542, 7
        %v544 = vsub.s32 %v541, %v543
        %v545 = vrot.slane %v531, %v544
        %v546 = vcombine.high %v538, %v538
        %v547 = vcombine.high %v545, %v545
        %v549 = vunpack.c.l.s4 1966171168
        %v550 = vunpack.c.0.s8 %v549
        %v551 = vlaneseq
        %v552 = vshrl.u32 %v551, 7
        %v553 = vsub.s32 %v550, %v552
        %v554 = vrot.slane %v305, %v553
        %v556 = vunpack.c.l.s4 1966171168
        %v557 = vunpack.c.0.s8 %v556
        %v558 = vlaneseq
        %v559 = vshrl.u32 %v558, 7
        %v560 = vsub.s32 %v557, %v559
        %v561 = vrot.slane %v554, %v560
        %v563 = vunpack.c.l.s4 1966171168
        %v564 = vunpack.c.0.s8 %v563
        %v565 = vlaneseq
        %v566 = vshrl.u32 %v565, 7
        %v567 = vsub.s32 %v564, %v566
        %v568 = vrot.slane %v306, %v567
        %v569 = vcombine.high %v568, %v568
        %v571 = vunpack.c.l.s4 1966171168
        %v572 = vunpack.c.0.s8 %v571
        %v573 = vlaneseq
        %v574 = vshrl.u32 %v573, 7
        %v575 = vsub.s32 %v572, %v574
        %v576 = vrot.slane %v568, %v575
        %v578 = vunpack.c.l.s4 1966171168
        %v579 = vunpack.c.0.s8 %v578
        %v580 = vlaneseq
        %v581 = vshrl.u32 %v580, 7
        %v582 = vsub.s32 %v579, %v581
        %v583 = vrot.slane %v569, %v582
        %v584 = vcombine.high %v576, %v576
        %v585 = vcombine.high %v583, %v583
        %v587 = vunpack.c.l.s4 1966171168
        %v588 = vunpack.c.0.s8 %v587
        %v589 = vlaneseq
        %v590 = vshrl.u32 %v589, 7
        %v591 = vsub.s32 %v588, %v590
        %v592 = vrot.slane %v307, %v591
        %v594 = vunpack.c.l.s4 1966171168
        %v595 = vunpack.c.0.s8 %v594
        %v596 = vlaneseq
        %v597 = vshrl.u32 %v596, 7
        %v598 = vsub.s32 %v595, %v597
        %v599 = vrot.slane %v592, %v598
        %v601 = vunpack.c.l.s4 1966171168
        %v602 = vunpack.c.0.s8 %v601
        %v603 = vlaneseq
        %v604 = vshrl.u32 %v603, 7
        %v605 = vsub.s32 %v602, %v604
        %v606 = vrot.slane %v308, %v605
        %v607 = vcombine.high %v606, %v606
        %v609 = vunpack.c.l.s4 1966171168
        %v610 = vunpack.c.0.s8 %v609
        %v611 = vlaneseq
        %v612 = vshrl.u32 %v611, 7
        %v613 = vsub.s32 %v610, %v612
        %v614 = vrot.slane %v606, %v613
        %v616 = vunpack.c.l.s4 1966171168
        %v617 = vunpack.c.0.s8 %v616
        %v618 = vlaneseq
        %v619 = vshrl.u32 %v618, 7
        %v620 = vsub.s32 %v617, %v619
        %v621 = vrot.slane %v607, %v620
        %v622 = vcombine.high %v614, %v614
        %v623 = vcombine.high %v621, %v621
        %v625 = vunpack.c.l.s4 1966171168
        %v626 = vunpack.c.0.s8 %v625
        %v627 = vlaneseq
        %v628 = vshrl.u32 %v627, 7
        %v629 = vsub.s32 %v626, %v628
        %v630 = vrot.slane %v309, %v629
        %v632 = vunpack.c.l.s4 1966171168
        %v633 = vunpack.c.0.s8 %v632
        %v634 = vlaneseq
        %v635 = vshrl.u32 %v634, 7
        %v636 = vsub.s32 %v633, %v635
        %v637 = vrot.slane %v630, %v636
        %v639 = vunpack.c.l.s4 1966171168
        %v640 = vunpack.c.0.s8 %v639
        %v641 = vlaneseq
        %v642 = vshrl.u32 %v641, 7
        %v643 = vsub.s32 %v640, %v642
        %v644 = vrot.slane %v310, %v643
        %v645 = vcombine.high %v644, %v644
        %v647 = vunpack.c.l.s4 1966171168
        %v648 = vunpack.c.0.s8 %v647
        %v649 = vlaneseq
        %v650 = vshrl.u32 %v649, 7
        %v651 = vsub.s32 %v648, %v650
        %v652 = vrot.slane %v644, %v651
        %v654 = vunpack.c.l.s4 1966171168
        %v655 = vunpack.c.0.s8 %v654
        %v656 = vlaneseq
        %v657 = vshrl.u32 %v656, 7
        %v658 = vsub.s32 %v655, %v657
        %v659 = vrot.slane %v645, %v658
        %v660 = vcombine.high %v652, %v652
        %v661 = vcombine.high %v659, %v659
        %v663 = vunpack.c.l.s4 1966171168
        %v664 = vunpack.c.0.s8 %v663
        %v665 = vlaneseq
        %v666 = vshrl.u32 %v665, 7
        %v667 = vsub.s32 %v664, %v666
        %v668 = vrot.slane %v311, %v667
        %v670 = vunpack.c.l.s4 1966171168
        %v671 = vunpack.c.0.s8 %v670
        %v672 = vlaneseq
        %v673 = vshrl.u32 %v672, 7
        %v674 = vsub.s32 %v671, %v673
        %v675 = vrot.slane %v668, %v674
        %v677 = vunpack.c.l.s4 1966171168
        %v678 = vunpack.c.0.s8 %v677
        %v679 = vlaneseq
        %v680 = vshrl.u32 %v679, 7
        %v681 = vsub.s32 %v678, %v680
        %v682 = vrot.slane %v312, %v681
        %v683 = vcombine.high %v682, %v682
        %v685 = vunpack.c.l.s4 1966171168
        %v686 = vunpack.c.0.s8 %v685
        %v687 = vlaneseq
        %v688 = vshrl.u32 %v687, 7
        %v689 = vsub.s32 %v686, %v688
        %v690 = vrot.slane %v682, %v689
        %v692 = vunpack.c.l.s4 1966171168
        %v693 = vunpack.c.0.s8 %v692
        %v694 = vlaneseq
        %v695 = vshrl.u32 %v694, 7
        %v696 = vsub.s32 %v693, %v695
        %v697 = vrot.slane %v683, %v696
        %v698 = vcombine.high %v690, %v690
        %v699 = vcombine.high %v697, %v697
        %v701 = vunpack.c.l.s4 1966171168
        %v702 = vunpack.c.0.s8 %v701
        %v703 = vlaneseq
        %v704 = vshrl.u32 %v703, 7
        %v705 = vsub.s32 %v702, %v704
        %v706 = vrot.slane %v313, %v705
        %v708 = vunpack.c.l.s4 1966171168
        %v709 = vunpack.c.0.s8 %v708
        %v710 = vlaneseq
        %v711 = vshrl.u32 %v710, 7
        %v712 = vsub.s32 %v709, %v711
        %v713 = vrot.slane %v706, %v712
        %v714 = vunpack.i.l.s16 %v348
        %v715 = vunpack.i.h.s16 %v348
        %v716 = vunpack.i.l.s16 %v355
        %v717 = vunpack.i.h.s16 %v355
        %v718 = vunpack.i.l.s16 %v356
        %v719 = vunpack.i.h.s16 %v356
        %v720 = vunpack.i.l.s16 %v357
        %v721 = vunpack.i.h.s16 %v357
        %v722 = vunpack.i.l.s16 %v371
        %v723 = vunpack.i.h.s16 %v371
        %v724 = vunpack.i.l.s16 %v386
        %v725 = vunpack.i.h.s16 %v386
        %v726 = vunpack.i.l.s16 %v393
        %v727 = vunpack.i.h.s16 %v393
        %v728 = vunpack.i.l.s16 %v394
        %v729 = vunpack.i.h.s16 %v394
        %v730 = vunpack.i.l.s16 %v395
        %v731 = vunpack.i.h.s16 %v395
        %v732 = vunpack.i.l.s16 %v409
        %v733 = vunpack.i.h.s16 %v409
        %v734 = vunpack.i.l.s16 %v424
        %v735 = vunpack.i.h.s16 %v424
        %v736 = vunpack.i.l.s16 %v431
        %v737 = vunpack.i.h.s16 %v431
        %v738 = vunpack.i.l.s16 %v432
        %v739 = vunpack.i.h.s16 %v432
        %v740 = vunpack.i.l.s16 %v433
        %v741 = vunpack.i.h.s16 %v433
        %v742 = vunpack.i.l.s16 %v447
        %v743 = vunpack.i.h.s16 %v447
        %v744 = vunpack.i.l.s16 %v462
        %v745 = vunpack.i.h.s16 %v462
        %v746 = vunpack.i.l.s16 %v469
        %v747 = vunpack.i.h.s16 %v469
        %v748 = vunpack.i.l.s16 %v470
        %v749 = vunpack.i.h.s16 %v470
        %v750 = vunpack.i.l.s16 %v471
        %v751 = vunpack.i.h.s16 %v471
        %v752 = vunpack.i.l.s16 %v485
        %v753 = vunpack.i.h.s16 %v485
        %v754 = vunpack.i.l.s16 %v500
        %v755 = vunpack.i.h.s16 %v500
        %v756 = vunpack.i.l.s16 %v507
        %v757 = vunpack.i.h.s16 %v507
        %v758 = vunpack.i.l.s16 %v508
        %v759 = vunpack.i.h.s16 %v508
        %v760 = vunpack.i.l.s16 %v509
        %v761 = vunpack.i.h.s16 %v509
        %v762 = vunpack.i.l.s16 %v523
        %v763 = vunpack.i.h.s16 %v523
        %v764 = vunpack.i.l.s16 %v538
        %v765 = vunpack.i.h.s16 %v538
        %v766 = vunpack.i.l.s16 %v545
        %v767 = vunpack.i.h.s16 %v545
        %v768 = vunpack.i.l.s16 %v546
        %v769 = vunpack.i.h.s16 %v546
        %v770 = vunpack.i.l.s16 %v547
        %v771 = vunpack.i.h.s16 %v547
        %v772 = vunpack.i.l.s16 %v561
        %v773 = vunpack.i.h.s16 %v561
        %v774 = vunpack.i.l.s16 %v576
        %v775 = vunpack.i.h.s16 %v576
        %v776 = vunpack.i.l.s16 %v583
        %v777 = vunpack.i.h.s16 %v583
        %v778 = vunpack.i.l.s16 %v584
        %v779 = vunpack.i.h.s16 %v584
        %v780 = vunpack.i.l.s16 %v585
        %v781 = vunpack.i.h.s16 %v585
        %v782 = vunpack.i.l.s16 %v599
        %v783 = vunpack.i.h.s16 %v599
        %v784 = vunpack.i.l.s16 %v614
        %v785 = vunpack.i.h.s16 %v614
        %v786 = vunpack.i.l.s16 %v621
        %v787 = vunpack.i.h.s16 %v621
        %v788 = vunpack.i.l.s16 %v622
        %v789 = vunpack.i.h.s16 %v622
        %v790 = vunpack.i.l.s16 %v623
        %v791 = vunpack.i.h.s16 %v623
        %v792 = vunpack.i.l.s16 %v637
        %v793 = vunpack.i.h.s16 %v637
        %v794 = vunpack.i.l.s16 %v652
        %v795 = vunpack.i.h.s16 %v652
        %v796 = vunpack.i.l.s16 %v659
        %v797 = vunpack.i.h.s16 %v659
        %v798 = vunpack.i.l.s16 %v660
        %v799 = vunpack.i.h.s16 %v660
        %v800 = vunpack.i.l.s16 %v661
        %v801 = vunpack.i.h.s16 %v661
        %v802 = vunpack.i.l.s16 %v675
        %v803 = vunpack.i.h.s16 %v675
        %v804 = vunpack.i.l.s16 %v690
        %v805 = vunpack.i.h.s16 %v690
        %v806 = vunpack.i.l.s16 %v697
        %v807 = vunpack.i.h.s16 %v697
        %v808 = vunpack.i.l.s16 %v698
        %v809 = vunpack.i.h.s16 %v698
        %v810 = vunpack.i.l.s16 %v699
        %v811 = vunpack.i.h.s16 %v699
        %v812 = vunpack.i.l.s16 %v713
        %v813 = vunpack.i.h.s16 %v713
        %v814 = vpack.i.b16 %v714, %v714
        %v815 = vpack.i.b16 %v715, %v715
        %v816 = vpack.i.b16 %v716, %v716
        %v817 = vpack.i.b16 %v717, %v717
        %v818 = vpack.i.b16 %v718, %v718
        %v819 = vpack.i.b16 %v719, %v719
        %v820 = vpack.i.b16 %v720, %v720
        %v821 = vpack.i.b16 %v721, %v721
        %v822 = vpack.i.b16 %v722, %v722
        %v823 = vpack.i.b16 %v723, %v723
        %v824 = vpack.i.b16 %v724, %v724
        %v825 = vpack.i.b16 %v725, %v725
        %v826 = vpack.i.b16 %v726, %v726
        %v827 = vpack.i.b16 %v727, %v727
        %v828 = vpack.i.b16 %v728, %v728
        %v829 = vpack.i.b16 %v729, %v729
        %v830 = vpack.i.b16 %v730, %v730
        %v831 = vpack.i.b16 %v731, %v731
        %v832 = vpack.i.b16 %v732, %v732
        %v833 = vpack.i.b16 %v733, %v733
        %v834 = vpack.i.b16 %v734, %v734
        %v835 = vpack.i.b16 %v735, %v735
        %v836 = vpack.i.b16 %v736, %v736
        %v837 = vpack.i.b16 %v737, %v737
        %v838 = vpack.i.b16 %v738, %v738
        %v839 = vpack.i.b16 %v739, %v739
        %v840 = vpack.i.b16 %v740, %v740
        %v841 = vpack.i.b16 %v741, %v741
        %v842 = vpack.i.b16 %v742, %v742
        %v843 = vpack.i.b16 %v743, %v743
        %v844 = vpack.i.b16 %v744, %v744
        %v845 = vpack.i.b16 %v745, %v745
        %v846 = vpack.i.b16 %v746, %v746
        %v847 = vpack.i.b16 %v747, %v747
        %v848 = vpack.i.b16 %v748, %v748
        %v849 = vpack.i.b16 %v749, %v749
        %v850 = vpack.i.b16 %v750, %v750
        %v851 = vpack.i.b16 %v751, %v751
        %v852 = vpack.i.b16 %v752, %v752
        %v853 = vpack.i.b16 %v753, %v753
        %v854 = vpack.i.b16 %v754, %v754
        %v855 = vpack.i.b16 %v755, %v755
        %v856 = vpack.i.b16 %v756, %v756
        %v857 = vpack.i.b16 %v757, %v757
        %v858 = vpack.i.b16 %v758, %v758
        %v859 = vpack.i.b16 %v759, %v759
        %v860 = vpack.i.b16 %v760, %v760
        %v861 = vpack.i.b16 %v761, %v761
        %v862 = vpack.i.b16 %v762, %v762
        %v863 = vpack.i.b16 %v763, %v763
        %v864 = vpack.i.b16 %v764, %v764
        %v865 = vpack.i.b16 %v765, %v765
        %v866 = vpack.i.b16 %v766, %v766
        %v867 = vpack.i.b16 %v767, %v767
        %v868 = vpack.i.b16 %v768, %v768
        %v869 = vpack.i.b16 %v769, %v769
        %v870 = vpack.i.b16 %v770, %v770
        %v871 = vpack.i.b16 %v771, %v771
        %v872 = vpack.i.b16 %v772, %v772
        %v873 = vpack.i.b16 %v773, %v773
        %v874 = vpack.i.b16 %v774, %v774
        %v875 = vpack.i.b16 %v775, %v775
        %v876 = vpack.i.b16 %v776, %v776
        %v877 = vpack.i.b16 %v777, %v777
        %v878 = vpack.i.b16 %v778, %v778
        %v879 = vpack.i.b16 %v779, %v779
        %v880 = vpack.i.b16 %v780, %v780
        %v881 = vpack.i.b16 %v781, %v781
        %v882 = vpack.i.b16 %v782, %v782
        %v883 = vpack.i.b16 %v783, %v783
        %v884 = vpack.i.b16 %v784, %v784
        %v885 = vpack.i.b16 %v785, %v785
        %v886 = vpack.i.b16 %v786, %v786
        %v887 = vpack.i.b16 %v787, %v787
        %v888 = vpack.i.b16 %v788, %v788
        %v889 = vpack.i.b16 %v789, %v789
        %v890 = vpack.i.b16 %v790, %v790
        %v891 = vpack.i.b16 %v791, %v791
        %v892 = vpack.i.b16 %v792, %v792
        %v893 = vpack.i.b16 %v793, %v793
        %v894 = vpack.i.b16 %v794, %v794
        %v895 = vpack.i.b16 %v795, %v795
        %v896 = vpack.i.b16 %v796, %v796
        %v897 = vpack.i.b16 %v797, %v797
        %v898 = vpack.i.b16 %v798, %v798
        %v899 = vpack.i.b16 %v799, %v799
        %v900 = vpack.i.b16 %v800, %v800
        %v901 = vpack.i.b16 %v801, %v801
        %v902 = vpack.i.b16 %v802, %v802
        %v903 = vpack.i.b16 %v803, %v803
        %v904 = vpack.i.b16 %v804, %v804
        %v905 = vpack.i.b16 %v805, %v805
        %v906 = vpack.i.b16 %v806, %v806
        %v907 = vpack.i.b16 %v807, %v807
        %v908 = vpack.i.b16 %v808, %v808
        %v909 = vpack.i.b16 %v809, %v809
        %v910 = vpack.i.b16 %v810, %v810
        %v911 = vpack.i.b16 %v811, %v811
        %v912 = vpack.i.b16 %v812, %v812
        %v913 = vpack.i.b16 %v813, %v813
        %v914 = vlaneseq
        %v915 = vshrl.u32 %v914, 7
        %v916 = vsub.s32 0, %v915
        %v917 = vrot.slane %v814, %v916
        %v918 = vlaneseq
        %v919 = vshrl.u32 %v918, 7
        %v920 = vsub.s32 0, %v919
        %v921 = vrot.slane %v815, %v920
        %v922 = vlaneseq
        %v923 = vshrl.u32 %v922, 7
        %v924 = vsub.s32 0, %v923
        %v925 = vrot.slane %v816, %v924
        %v926 = vlaneseq
        %v927 = vshrl.u32 %v926, 7
        %v928 = vsub.s32 0, %v927
        %v929 = vrot.slane %v817, %v928
        %v930 = vlaneseq
        %v931 = vshrl.u32 %v930, 7
        %v932 = vsub.s32 0, %v931
        %v933 = vrot.slane %v818, %v932
        %v934 = vlaneseq
        %v935 = vshrl.u32 %v934, 7
        %v936 = vsub.s32 0, %v935
        %v937 = vrot.slane %v819, %v936
        %v938 = vlaneseq
        %v939 = vshrl.u32 %v938, 7
        %v940 = vsub.s32 0, %v939
        %v941 = vrot.slane %v820, %v940
        %v942 = vlaneseq
        %v943 = vshrl.u32 %v942, 7
        %v944 = vsub.s32 0, %v943
        %v945 = vrot.slane %v821, %v944
        %v946 = vlaneseq
        %v947 = vshrl.u32 %v946, 7
        %v948 = vsub.s32 0, %v947
        %v949 = vrot.slane %v822, %v948
        %v950 = vlaneseq
        %v951 = vshrl.u32 %v950, 7
        %v952 = vsub.s32 0, %v951
        %v953 = vrot.slane %v823, %v952
        %v954 = vlaneseq
        %v955 = vshrl.u32 %v954, 7
        %v956 = vsub.s32 0, %v955
        %v957 = vrot.slane %v824, %v956
        %v958 = vlaneseq
        %v959 = vshrl.u32 %v958, 7
        %v960 = vsub.s32 0, %v959
        %v961 = vrot.slane %v825, %v960
        %v962 = vlaneseq
        %v963 = vshrl.u32 %v962, 7
        %v964 = vsub.s32 0, %v963
        %v965 = vrot.slane %v826, %v964
        %v966 = vlaneseq
        %v967 = vshrl.u32 %v966, 7
        %v968 = vsub.s32 0, %v967
        %v969 = vrot.slane %v827, %v968
        %v970 = vlaneseq
        %v971 = vshrl.u32 %v970, 7
        %v972 = vsub.s32 0, %v971
        %v973 = vrot.slane %v828, %v972
        %v974 = vlaneseq
        %v975 = vshrl.u32 %v974, 7
        %v976 = vsub.s32 0, %v975
        %v977 = vrot.slane %v829, %v976
        %v978 = vlaneseq
        %v979 = vshrl.u32 %v978, 7
        %v980 = vsub.s32 0, %v979
        %v981 = vrot.slane %v830, %v980
        %v982 = vlaneseq
        %v983 = vshrl.u32 %v982, 7
        %v984 = vsub.s32 0, %v983
        %v985 = vrot.slane %v831, %v984
        %v986 = vlaneseq
        %v987 = vshrl.u32 %v986, 7
        %v988 = vsub.s32 0, %v987
        %v989 = vrot.slane %v832, %v988
        %v990 = vlaneseq
        %v991 = vshrl.u32 %v990, 7
        %v992 = vsub.s32 0, %v991
        %v993 = vrot.slane %v833, %v992
        %v994 = vlaneseq
        %v995 = vshrl.u32 %v994, 7
        %v996 = vsub.s32 0, %v995
        %v997 = vrot.slane %v834, %v996
        %v998 = vlaneseq
        %v999 = vshrl.u32 %v998, 7
        %v1000 = vsub.s32 0, %v999
        %v1001 = vrot.slane %v835, %v1000
        %v1002 = vlaneseq
        %v1003 = vshrl.u32 %v1002, 7
        %v1004 = vsub.s32 0, %v1003
        %v1005 = vrot.slane %v836, %v1004
        %v1006 = vlaneseq
        %v1007 = vshrl.u32 %v1006, 7
        %v1008 = vsub.s32 0, %v1007
        %v1009 = vrot.slane %v837, %v1008
        %v1010 = vlaneseq
        %v1011 = vshrl.u32 %v1010, 7
        %v1012 = vsub.s32 0, %v1011
        %v1013 = vrot.slane %v838, %v1012
        %v1014 = vlaneseq
        %v1015 = vshrl.u32 %v1014, 7
        %v1016 = vsub.s32 0, %v1015
        %v1017 = vrot.slane %v839, %v1016
        %v1018 = vlaneseq
        %v1019 = vshrl.u32 %v1018, 7
        %v1020 = vsub.s32 0, %v1019
        %v1021 = vrot.slane %v840, %v1020
        %v1022 = vlaneseq
        %v1023 = vshrl.u32 %v1022, 7
        %v1024 = vsub.s32 0, %v1023
        %v1025 = vrot.slane %v841, %v1024
        %v1026 = vlaneseq
        %v1027 = vshrl.u32 %v1026, 7
        %v1028 = vsub.s32 0, %v1027
        %v1029 = vrot.slane %v842, %v1028
        %v1030 = vlaneseq
        %v1031 = vshrl.u32 %v1030, 7
        %v1032 = vsub.s32 0, %v1031
        %v1033 = vrot.slane %v843, %v1032
        %v1034 = vlaneseq
        %v1035 = vshrl.u32 %v1034, 7
        %v1036 = vsub.s32 0, %v1035
        %v1037 = vrot.slane %v844, %v1036
        %v1038 = vlaneseq
        %v1039 = vshrl.u32 %v1038, 7
        %v1040 = vsub.s32 0, %v1039
        %v1041 = vrot.slane %v845, %v1040
        %v1042 = vlaneseq
        %v1043 = vshrl.u32 %v1042, 7
        %v1044 = vsub.s32 0, %v1043
        %v1045 = vrot.slane %v846, %v1044
        %v1046 = vlaneseq
        %v1047 = vshrl.u32 %v1046, 7
        %v1048 = vsub.s32 0, %v1047
        %v1049 = vrot.slane %v847, %v1048
        %v1050 = vlaneseq
        %v1051 = vshrl.u32 %v1050, 7
        %v1052 = vsub.s32 0, %v1051
        %v1053 = vrot.slane %v848, %v1052
        %v1054 = vlaneseq
        %v1055 = vshrl.u32 %v1054, 7
        %v1056 = vsub.s32 0, %v1055
        %v1057 = vrot.slane %v849, %v1056
        %v1058 = vlaneseq
        %v1059 = vshrl.u32 %v1058, 7
        %v1060 = vsub.s32 0, %v1059
        %v1061 = vrot.slane %v850, %v1060
        %v1062 = vlaneseq
        %v1063 = vshrl.u32 %v1062, 7
        %v1064 = vsub.s32 0, %v1063
        %v1065 = vrot.slane %v851, %v1064
        %v1066 = vlaneseq
        %v1067 = vshrl.u32 %v1066, 7
        %v1068 = vsub.s32 0, %v1067
        %v1069 = vrot.slane %v852, %v1068
        %v1070 = vlaneseq
        %v1071 = vshrl.u32 %v1070, 7
        %v1072 = vsub.s32 0, %v1071
        %v1073 = vrot.slane %v853, %v1072
        %v1074 = vlaneseq
        %v1075 = vshrl.u32 %v1074, 7
        %v1076 = vsub.s32 0, %v1075
        %v1077 = vrot.slane %v854, %v1076
        %v1078 = vlaneseq
        %v1079 = vshrl.u32 %v1078, 7
        %v1080 = vsub.s32 0, %v1079
        %v1081 = vrot.slane %v855, %v1080
        %v1082 = vlaneseq
        %v1083 = vshrl.u32 %v1082, 7
        %v1084 = vsub.s32 0, %v1083
        %v1085 = vrot.slane %v856, %v1084
        %v1086 = vlaneseq
        %v1087 = vshrl.u32 %v1086, 7
        %v1088 = vsub.s32 0, %v1087
        %v1089 = vrot.slane %v857, %v1088
        %v1090 = vlaneseq
        %v1091 = vshrl.u32 %v1090, 7
        %v1092 = vsub.s32 0, %v1091
        %v1093 = vrot.slane %v858, %v1092
        %v1094 = vlaneseq
        %v1095 = vshrl.u32 %v1094, 7
        %v1096 = vsub.s32 0, %v1095
        %v1097 = vrot.slane %v859, %v1096
        %v1098 = vlaneseq
        %v1099 = vshrl.u32 %v1098, 7
        %v1100 = vsub.s32 0, %v1099
        %v1101 = vrot.slane %v860, %v1100
        %v1102 = vlaneseq
        %v1103 = vshrl.u32 %v1102, 7
        %v1104 = vsub.s32 0, %v1103
        %v1105 = vrot.slane %v861, %v1104
        %v1106 = vlaneseq
        %v1107 = vshrl.u32 %v1106, 7
        %v1108 = vsub.s32 0, %v1107
        %v1109 = vrot.slane %v862, %v1108
        %v1110 = vlaneseq
        %v1111 = vshrl.u32 %v1110, 7
        %v1112 = vsub.s32 0, %v1111
        %v1113 = vrot.slane %v863, %v1112
        %v1114 = vlaneseq
        %v1115 = vshrl.u32 %v1114, 7
        %v1116 = vsub.s32 0, %v1115
        %v1117 = vrot.slane %v864, %v1116
        %v1118 = vlaneseq
        %v1119 = vshrl.u32 %v1118, 7
        %v1120 = vsub.s32 0, %v1119
        %v1121 = vrot.slane %v865, %v1120
        %v1122 = vlaneseq
        %v1123 = vshrl.u32 %v1122, 7
        %v1124 = vsub.s32 0, %v1123
        %v1125 = vrot.slane %v866, %v1124
        %v1126 = vlaneseq
        %v1127 = vshrl.u32 %v1126, 7
        %v1128 = vsub.s32 0, %v1127
        %v1129 = vrot.slane %v867, %v1128
        %v1130 = vlaneseq
        %v1131 = vshrl.u32 %v1130, 7
        %v1132 = vsub.s32 0, %v1131
        %v1133 = vrot.slane %v868, %v1132
        %v1134 = vlaneseq
        %v1135 = vshrl.u32 %v1134, 7
        %v1136 = vsub.s32 0, %v1135
        %v1137 = vrot.slane %v869, %v1136
        %v1138 = vlaneseq
        %v1139 = vshrl.u32 %v1138, 7
        %v1140 = vsub.s32 0, %v1139
        %v1141 = vrot.slane %v870, %v1140
        %v1142 = vlaneseq
        %v1143 = vshrl.u32 %v1142, 7
        %v1144 = vsub.s32 0, %v1143
        %v1145 = vrot.slane %v871, %v1144
        %v1146 = vlaneseq
        %v1147 = vshrl.u32 %v1146, 7
        %v1148 = vsub.s32 0, %v1147
        %v1149 = vrot.slane %v872, %v1148
        %v1150 = vlaneseq
        %v1151 = vshrl.u32 %v1150, 7
        %v1152 = vsub.s32 0, %v1151
        %v1153 = vrot.slane %v873, %v1152
        %v1154 = vlaneseq
        %v1155 = vshrl.u32 %v1154, 7
        %v1156 = vsub.s32 0, %v1155
        %v1157 = vrot.slane %v874, %v1156
        %v1158 = vlaneseq
        %v1159 = vshrl.u32 %v1158, 7
        %v1160 = vsub.s32 0, %v1159
        %v1161 = vrot.slane %v875, %v1160
        %v1162 = vlaneseq
        %v1163 = vshrl.u32 %v1162, 7
        %v1164 = vsub.s32 0, %v1163
        %v1165 = vrot.slane %v876, %v1164
        %v1166 = vlaneseq
        %v1167 = vshrl.u32 %v1166, 7
        %v1168 = vsub.s32 0, %v1167
        %v1169 = vrot.slane %v877, %v1168
        %v1170 = vlaneseq
        %v1171 = vshrl.u32 %v1170, 7
        %v1172 = vsub.s32 0, %v1171
        %v1173 = vrot.slane %v878, %v1172
        %v1174 = vlaneseq
        %v1175 = vshrl.u32 %v1174, 7
        %v1176 = vsub.s32 0, %v1175
        %v1177 = vrot.slane %v879, %v1176
        %v1178 = vlaneseq
        %v1179 = vshrl.u32 %v1178, 7
        %v1180 = vsub.s32 0, %v1179
        %v1181 = vrot.slane %v880, %v1180
        %v1182 = vlaneseq
        %v1183 = vshrl.u32 %v1182, 7
        %v1184 = vsub.s32 0, %v1183
        %v1185 = vrot.slane %v881, %v1184
        %v1186 = vlaneseq
        %v1187 = vshrl.u32 %v1186, 7
        %v1188 = vsub.s32 0, %v1187
        %v1189 = vrot.slane %v882, %v1188
        %v1190 = vlaneseq
        %v1191 = vshrl.u32 %v1190, 7
        %v1192 = vsub.s32 0, %v1191
        %v1193 = vrot.slane %v883, %v1192
        %v1194 = vlaneseq
        %v1195 = vshrl.u32 %v1194, 7
        %v1196 = vsub.s32 0, %v1195
        %v1197 = vrot.slane %v884, %v1196
        %v1198 = vlaneseq
        %v1199 = vshrl.u32 %v1198, 7
        %v1200 = vsub.s32 0, %v1199
        %v1201 = vrot.slane %v885, %v1200
        %v1202 = vlaneseq
        %v1203 = vshrl.u32 %v1202, 7
        %v1204 = vsub.s32 0, %v1203
        %v1205 = vrot.slane %v886, %v1204
        %v1206 = vlaneseq
        %v1207 = vshrl.u32 %v1206, 7
        %v1208 = vsub.s32 0, %v1207
        %v1209 = vrot.slane %v887, %v1208
        %v1210 = vlaneseq
        %v1211 = vshrl.u32 %v1210, 7
        %v1212 = vsub.s32 0, %v1211
        %v1213 = vrot.slane %v888, %v1212
        %v1214 = vlaneseq
        %v1215 = vshrl.u32 %v1214, 7
        %v1216 = vsub.s32 0, %v1215
        %v1217 = vrot.slane %v889, %v1216
        %v1218 = vlaneseq
        %v1219 = vshrl.u32 %v1218, 7
        %v1220 = vsub.s32 0, %v1219
        %v1221 = vrot.slane %v890, %v1220
        %v1222 = vlaneseq
        %v1223 = vshrl.u32 %v1222, 7
        %v1224 = vsub.s32 0, %v1223
        %v1225 = vrot.slane %v891, %v1224
        %v1226 = vlaneseq
        %v1227 = vshrl.u32 %v1226, 7
        %v1228 = vsub.s32 0, %v1227
        %v1229 = vrot.slane %v892, %v1228
        %v1230 = vlaneseq
        %v1231 = vshrl.u32 %v1230, 7
        %v1232 = vsub.s32 0, %v1231
        %v1233 = vrot.slane %v893, %v1232
        %v1234 = vlaneseq
        %v1235 = vshrl.u32 %v1234, 7
        %v1236 = vsub.s32 0, %v1235
        %v1237 = vrot.slane %v894, %v1236
        %v1238 = vlaneseq
        %v1239 = vshrl.u32 %v1238, 7
        %v1240 = vsub.s32 0, %v1239
        %v1241 = vrot.slane %v895, %v1240
        %v1242 = vlaneseq
        %v1243 = vshrl.u32 %v1242, 7
        %v1244 = vsub.s32 0, %v1243
        %v1245 = vrot.slane %v896, %v1244
        %v1246 = vlaneseq
        %v1247 = vshrl.u32 %v1246, 7
        %v1248 = vsub.s32 0, %v1247
        %v1249 = vrot.slane %v897, %v1248
        %v1250 = vlaneseq
        %v1251 = vshrl.u32 %v1250, 7
        %v1252 = vsub.s32 0, %v1251
        %v1253 = vrot.slane %v898, %v1252
        %v1254 = vlaneseq
        %v1255 = vshrl.u32 %v1254, 7
        %v1256 = vsub.s32 0, %v1255
        %v1257 = vrot.slane %v899, %v1256
        %v1258 = vlaneseq
        %v1259 = vshrl.u32 %v1258, 7
        %v1260 = vsub.s32 0, %v1259
        %v1261 = vrot.slane %v900, %v1260
        %v1262 = vlaneseq
        %v1263 = vshrl.u32 %v1262, 7
        %v1264 = vsub.s32 0, %v1263
        %v1265 = vrot.slane %v901, %v1264
        %v1266 = vlaneseq
        %v1267 = vshrl.u32 %v1266, 7
        %v1268 = vsub.s32 0, %v1267
        %v1269 = vrot.slane %v902, %v1268
        %v1270 = vlaneseq
        %v1271 = vshrl.u32 %v1270, 7
        %v1272 = vsub.s32 0, %v1271
        %v1273 = vrot.slane %v903, %v1272
        %v1274 = vlaneseq
        %v1275 = vshrl.u32 %v1274, 7
        %v1276 = vsub.s32 0, %v1275
        %v1277 = vrot.slane %v904, %v1276
        %v1278 = vlaneseq
        %v1279 = vshrl.u32 %v1278, 7
        %v1280 = vsub.s32 0, %v1279
        %v1281 = vrot.slane %v905, %v1280
        %v1282 = vlaneseq
        %v1283 = vshrl.u32 %v1282, 7
        %v1284 = vsub.s32 0, %v1283
        %v1285 = vrot.slane %v906, %v1284
        %v1286 = vlaneseq
        %v1287 = vshrl.u32 %v1286, 7
        %v1288 = vsub.s32 0, %v1287
        %v1289 = vrot.slane %v907, %v1288
        %v1290 = vlaneseq
        %v1291 = vshrl.u32 %v1290, 7
        %v1292 = vsub.s32 0, %v1291
        %v1293 = vrot.slane %v908, %v1292
        %v1294 = vlaneseq
        %v1295 = vshrl.u32 %v1294, 7
        %v1296 = vsub.s32 0, %v1295
        %v1297 = vrot.slane %v909, %v1296
        %v1298 = vlaneseq
        %v1299 = vshrl.u32 %v1298, 7
        %v1300 = vsub.s32 0, %v1299
        %v1301 = vrot.slane %v910, %v1300
        %v1302 = vlaneseq
        %v1303 = vshrl.u32 %v1302, 7
        %v1304 = vsub.s32 0, %v1303
        %v1305 = vrot.slane %v911, %v1304
        %v1306 = vlaneseq
        %v1307 = vshrl.u32 %v1306, 7
        %v1308 = vsub.s32 0, %v1307
        %v1309 = vrot.slane %v912, %v1308
        %v1310 = vlaneseq
        %v1311 = vshrl.u32 %v1310, 7
        %v1312 = vsub.s32 0, %v1311
        %v1313 = vrot.slane %v913, %v1312
        %v1315 = vpack.i.b16 %v917, %v917
        %v1317 = vlaneseq
        %v1318 = vshrl.u32 %v1317, 7
        %v1319 = vsub.s32 0, %v1318
        %v1320 = vrot.slane %v1315, %v1319
        %v1322 = vpack.i.b16 %v921, %v921
        %v1324 = vlaneseq
        %v1325 = vshrl.u32 %v1324, 7
        %v1326 = vsub.s32 0, %v1325
        %v1327 = vrot.slane %v1322, %v1326
        %v1329 = vpack.i.b16 %v925, %v925
        %v1331 = vlaneseq
        %v1332 = vshrl.u32 %v1331, 7
        %v1333 = vsub.s32 0, %v1332
        %v1334 = vrot.slane %v1329, %v1333
        %v1336 = vpack.i.b16 %v929, %v929
        %v1338 = vlaneseq
        %v1339 = vshrl.u32 %v1338, 7
        %v1340 = vsub.s32 0, %v1339
        %v1341 = vrot.slane %v1336, %v1340
        %v1343 = vpack.i.b16 %v933, %v933
        %v1345 = vlaneseq
        %v1346 = vshrl.u32 %v1345, 7
        %v1347 = vsub.s32 0, %v1346
        %v1348 = vrot.slane %v1343, %v1347
        %v1350 = vpack.i.b16 %v937, %v937
        %v1352 = vlaneseq
        %v1353 = vshrl.u32 %v1352, 7
        %v1354 = vsub.s32 0, %v1353
        %v1355 = vrot.slane %v1350, %v1354
        %v1357 = vpack.i.b16 %v941, %v941
        %v1359 = vlaneseq
        %v1360 = vshrl.u32 %v1359, 7
        %v1361 = vsub.s32 0, %v1360
        %v1362 = vrot.slane %v1357, %v1361
        %v1364 = vpack.i.b16 %v945, %v945
        %v1366 = vlaneseq
        %v1367 = vshrl.u32 %v1366, 7
        %v1368 = vsub.s32 0, %v1367
        %v1369 = vrot.slane %v1364, %v1368
        %v1371 = vpack.i.b16 %v949, %v949
        %v1373 = vlaneseq
        %v1374 = vshrl.u32 %v1373, 7
        %v1375 = vsub.s32 0, %v1374
        %v1376 = vrot.slane %v1371, %v1375
        %v1378 = vpack.i.b16 %v953, %v953
        %v1380 = vlaneseq
        %v1381 = vshrl.u32 %v1380, 7
        %v1382 = vsub.s32 0, %v1381
        %v1383 = vrot.slane %v1378, %v1382
        %v1385 = vpack.i.b16 %v957, %v957
        %v1387 = vlaneseq
        %v1388 = vshrl.u32 %v1387, 7
        %v1389 = vsub.s32 0, %v1388
        %v1390 = vrot.slane %v1385, %v1389
        %v1392 = vpack.i.b16 %v961, %v961
        %v1394 = vlaneseq
        %v1395 = vshrl.u32 %v1394, 7
        %v1396 = vsub.s32 0, %v1395
        %v1397 = vrot.slane %v1392, %v1396
        %v1399 = vpack.i.b16 %v965, %v965
        %v1401 = vlaneseq
        %v1402 = vshrl.u32 %v1401, 7
        %v1403 = vsub.s32 0, %v1402
        %v1404 = vrot.slane %v1399, %v1403
        %v1406 = vpack.i.b16 %v969, %v969
        %v1408 = vlaneseq
        %v1409 = vshrl.u32 %v1408, 7
        %v1410 = vsub.s32 0, %v1409
        %v1411 = vrot.slane %v1406, %v1410
        %v1413 = vpack.i.b16 %v973, %v973
        %v1415 = vlaneseq
        %v1416 = vshrl.u32 %v1415, 7
        %v1417 = vsub.s32 0, %v1416
        %v1418 = vrot.slane %v1413, %v1417
        %v1420 = vpack.i.b16 %v977, %v977
        %v1422 = vlaneseq
        %v1423 = vshrl.u32 %v1422, 7
        %v1424 = vsub.s32 0, %v1423
        %v1425 = vrot.slane %v1420, %v1424
        %v1427 = vpack.i.b16 %v981, %v981
        %v1429 = vlaneseq
        %v1430 = vshrl.u32 %v1429, 7
        %v1431 = vsub.s32 0, %v1430
        %v1432 = vrot.slane %v1427, %v1431
        %v1434 = vpack.i.b16 %v985, %v985
        %v1436 = vlaneseq
        %v1437 = vshrl.u32 %v1436, 7
        %v1438 = vsub.s32 0, %v1437
        %v1439 = vrot.slane %v1434, %v1438
        %v1441 = vpack.i.b16 %v989, %v989
        %v1443 = vlaneseq
        %v1444 = vshrl.u32 %v1443, 7
        %v1445 = vsub.s32 0, %v1444
        %v1446 = vrot.slane %v1441, %v1445
        %v1448 = vpack.i.b16 %v993, %v993
        %v1450 = vlaneseq
        %v1451 = vshrl.u32 %v1450, 7
        %v1452 = vsub.s32 0, %v1451
        %v1453 = vrot.slane %v1448, %v1452
        %v1455 = vpack.i.b16 %v997, %v997
        %v1457 = vlaneseq
        %v1458 = vshrl.u32 %v1457, 7
        %v1459 = vsub.s32 0, %v1458
        %v1460 = vrot.slane %v1455, %v1459
        %v1462 = vpack.i.b16 %v1001, %v1001
        %v1464 = vlaneseq
        %v1465 = vshrl.u32 %v1464, 7
        %v1466 = vsub.s32 0, %v1465
        %v1467 = vrot.slane %v1462, %v1466
        %v1469 = vpack.i.b16 %v1005, %v1005
        %v1471 = vlaneseq
        %v1472 = vshrl.u32 %v1471, 7
        %v1473 = vsub.s32 0, %v1472
        %v1474 = vrot.slane %v1469, %v1473
        %v1476 = vpack.i.b16 %v1009, %v1009
        %v1478 = vlaneseq
        %v1479 = vshrl.u32 %v1478, 7
        %v1480 = vsub.s32 0, %v1479
        %v1481 = vrot.slane %v1476, %v1480
        %v1483 = vpack.i.b16 %v1013, %v1013
        %v1485 = vlaneseq
        %v1486 = vshrl.u32 %v1485, 7
        %v1487 = vsub.s32 0, %v1486
        %v1488 = vrot.slane %v1483, %v1487
        %v1490 = vpack.i.b16 %v1017, %v1017
        %v1492 = vlaneseq
        %v1493 = vshrl.u32 %v1492, 7
        %v1494 = vsub.s32 0, %v1493
        %v1495 = vrot.slane %v1490, %v1494
        %v1497 = vpack.i.b16 %v1021, %v1021
        %v1499 = vlaneseq
        %v1500 = vshrl.u32 %v1499, 7
        %v1501 = vsub.s32 0, %v1500
        %v1502 = vrot.slane %v1497, %v1501
        %v1504 = vpack.i.b16 %v1025, %v1025
        %v1506 = vlaneseq
        %v1507 = vshrl.u32 %v1506, 7
        %v1508 = vsub.s32 0, %v1507
        %v1509 = vrot.slane %v1504, %v1508
        %v1511 = vpack.i.b16 %v1029, %v1029
        %v1513 = vlaneseq
        %v1514 = vshrl.u32 %v1513, 7
        %v1515 = vsub.s32 0, %v1514
        %v1516 = vrot.slane %v1511, %v1515
        %v1518 = vpack.i.b16 %v1033, %v1033
        %v1520 = vlaneseq
        %v1521 = vshrl.u32 %v1520, 7
        %v1522 = vsub.s32 0, %v1521
        %v1523 = vrot.slane %v1518, %v1522
        %v1525 = vpack.i.b16 %v1037, %v1037
        %v1527 = vlaneseq
        %v1528 = vshrl.u32 %v1527, 7
        %v1529 = vsub.s32 0, %v1528
        %v1530 = vrot.slane %v1525, %v1529
        %v1532 = vpack.i.b16 %v1041, %v1041
        %v1534 = vlaneseq
        %v1535 = vshrl.u32 %v1534, 7
        %v1536 = vsub.s32 0, %v1535
        %v1537 = vrot.slane %v1532, %v1536
        %v1539 = vpack.i.b16 %v1045, %v1045
        %v1541 = vlaneseq
        %v1542 = vshrl.u32 %v1541, 7
        %v1543 = vsub.s32 0, %v1542
        %v1544 = vrot.slane %v1539, %v1543
        %v1546 = vpack.i.b16 %v1049, %v1049
        %v1548 = vlaneseq
        %v1549 = vshrl.u32 %v1548, 7
        %v1550 = vsub.s32 0, %v1549
        %v1551 = vrot.slane %v1546, %v1550
        %v1553 = vpack.i.b16 %v1053, %v1053
        %v1555 = vlaneseq
        %v1556 = vshrl.u32 %v1555, 7
        %v1557 = vsub.s32 0, %v1556
        %v1558 = vrot.slane %v1553, %v1557
        %v1560 = vpack.i.b16 %v1057, %v1057
        %v1562 = vlaneseq
        %v1563 = vshrl.u32 %v1562, 7
        %v1564 = vsub.s32 0, %v1563
        %v1565 = vrot.slane %v1560, %v1564
        %v1567 = vpack.i.b16 %v1061, %v1061
        %v1569 = vlaneseq
        %v1570 = vshrl.u32 %v1569, 7
        %v1571 = vsub.s32 0, %v1570
        %v1572 = vrot.slane %v1567, %v1571
        %v1574 = vpack.i.b16 %v1065, %v1065
        %v1576 = vlaneseq
        %v1577 = vshrl.u32 %v1576, 7
        %v1578 = vsub.s32 0, %v1577
        %v1579 = vrot.slane %v1574, %v1578
        %v1581 = vpack.i.b16 %v1069, %v1069
        %v1583 = vlaneseq
        %v1584 = vshrl.u32 %v1583, 7
        %v1585 = vsub.s32 0, %v1584
        %v1586 = vrot.slane %v1581, %v1585
        %v1588 = vpack.i.b16 %v1073, %v1073
        %v1590 = vlaneseq
        %v1591 = vshrl.u32 %v1590, 7
        %v1592 = vsub.s32 0, %v1591
        %v1593 = vrot.slane %v1588, %v1592
        %v1595 = vpack.i.b16 %v1077, %v1077
        %v1597 = vlaneseq
        %v1598 = vshrl.u32 %v1597, 7
        %v1599 = vsub.s32 0, %v1598
        %v1600 = vrot.slane %v1595, %v1599
        %v1602 = vpack.i.b16 %v1081, %v1081
        %v1604 = vlaneseq
        %v1605 = vshrl.u32 %v1604, 7
        %v1606 = vsub.s32 0, %v1605
        %v1607 = vrot.slane %v1602, %v1606
        %v1609 = vpack.i.b16 %v1085, %v1085
        %v1611 = vlaneseq
        %v1612 = vshrl.u32 %v1611, 7
        %v1613 = vsub.s32 0, %v1612
        %v1614 = vrot.slane %v1609, %v1613
        %v1616 = vpack.i.b16 %v1089, %v1089
        %v1618 = vlaneseq
        %v1619 = vshrl.u32 %v1618, 7
        %v1620 = vsub.s32 0, %v1619
        %v1621 = vrot.slane %v1616, %v1620
        %v1623 = vpack.i.b16 %v1093, %v1093
        %v1625 = vlaneseq
        %v1626 = vshrl.u32 %v1625, 7
        %v1627 = vsub.s32 0, %v1626
        %v1628 = vrot.slane %v1623, %v1627
        %v1630 = vpack.i.b16 %v1097, %v1097
        %v1632 = vlaneseq
        %v1633 = vshrl.u32 %v1632, 7
        %v1634 = vsub.s32 0, %v1633
        %v1635 = vrot.slane %v1630, %v1634
        %v1637 = vpack.i.b16 %v1101, %v1101
        %v1639 = vlaneseq
        %v1640 = vshrl.u32 %v1639, 7
        %v1641 = vsub.s32 0, %v1640
        %v1642 = vrot.slane %v1637, %v1641
        %v1644 = vpack.i.b16 %v1105, %v1105
        %v1646 = vlaneseq
        %v1647 = vshrl.u32 %v1646, 7
        %v1648 = vsub.s32 0, %v1647
        %v1649 = vrot.slane %v1644, %v1648
        %v1651 = vpack.i.b16 %v1109, %v1109
        %v1653 = vlaneseq
        %v1654 = vshrl.u32 %v1653, 7
        %v1655 = vsub.s32 0, %v1654
        %v1656 = vrot.slane %v1651, %v1655
        %v1658 = vpack.i.b16 %v1113, %v1113
        %v1660 = vlaneseq
        %v1661 = vshrl.u32 %v1660, 7
        %v1662 = vsub.s32 0, %v1661
        %v1663 = vrot.slane %v1658, %v1662
        %v1665 = vpack.i.b16 %v1117, %v1117
        %v1667 = vlaneseq
        %v1668 = vshrl.u32 %v1667, 7
        %v1669 = vsub.s32 0, %v1668
        %v1670 = vrot.slane %v1665, %v1669
        %v1672 = vpack.i.b16 %v1121, %v1121
        %v1674 = vlaneseq
        %v1675 = vshrl.u32 %v1674, 7
        %v1676 = vsub.s32 0, %v1675
        %v1677 = vrot.slane %v1672, %v1676
        %v1679 = vpack.i.b16 %v1125, %v1125
        %v1681 = vlaneseq
        %v1682 = vshrl.u32 %v1681, 7
        %v1683 = vsub.s32 0, %v1682
        %v1684 = vrot.slane %v1679, %v1683
        %v1686 = vpack.i.b16 %v1129, %v1129
        %v1688 = vlaneseq
        %v1689 = vshrl.u32 %v1688, 7
        %v1690 = vsub.s32 0, %v1689
        %v1691 = vrot.slane %v1686, %v1690
        %v1693 = vpack.i.b16 %v1133, %v1133
        %v1695 = vlaneseq
        %v1696 = vshrl.u32 %v1695, 7
        %v1697 = vsub.s32 0, %v1696
        %v1698 = vrot.slane %v1693, %v1697
        %v1700 = vpack.i.b16 %v1137, %v1137
        %v1702 = vlaneseq
        %v1703 = vshrl.u32 %v1702, 7
        %v1704 = vsub.s32 0, %v1703
        %v1705 = vrot.slane %v1700, %v1704
        %v1707 = vpack.i.b16 %v1141, %v1141
        %v1709 = vlaneseq
        %v1710 = vshrl.u32 %v1709, 7
        %v1711 = vsub.s32 0, %v1710
        %v1712 = vrot.slane %v1707, %v1711
        %v1714 = vpack.i.b16 %v1145, %v1145
        %v1716 = vlaneseq
        %v1717 = vshrl.u32 %v1716, 7
        %v1718 = vsub.s32 0, %v1717
        %v1719 = vrot.slane %v1714, %v1718
        %v1721 = vpack.i.b16 %v1149, %v1149
        %v1723 = vlaneseq
        %v1724 = vshrl.u32 %v1723, 7
        %v1725 = vsub.s32 0, %v1724
        %v1726 = vrot.slane %v1721, %v1725
        %v1728 = vpack.i.b16 %v1153, %v1153
        %v1730 = vlaneseq
        %v1731 = vshrl.u32 %v1730, 7
        %v1732 = vsub.s32 0, %v1731
        %v1733 = vrot.slane %v1728, %v1732
        %v1735 = vpack.i.b16 %v1157, %v1157
        %v1737 = vlaneseq
        %v1738 = vshrl.u32 %v1737, 7
        %v1739 = vsub.s32 0, %v1738
        %v1740 = vrot.slane %v1735, %v1739
        %v1742 = vpack.i.b16 %v1161, %v1161
        %v1744 = vlaneseq
        %v1745 = vshrl.u32 %v1744, 7
        %v1746 = vsub.s32 0, %v1745
        %v1747 = vrot.slane %v1742, %v1746
        %v1749 = vpack.i.b16 %v1165, %v1165
        %v1751 = vlaneseq
        %v1752 = vshrl.u32 %v1751, 7
        %v1753 = vsub.s32 0, %v1752
        %v1754 = vrot.slane %v1749, %v1753
        %v1756 = vpack.i.b16 %v1169, %v1169
        %v1758 = vlaneseq
        %v1759 = vshrl.u32 %v1758, 7
        %v1760 = vsub.s32 0, %v1759
        %v1761 = vrot.slane %v1756, %v1760
        %v1763 = vpack.i.b16 %v1173, %v1173
        %v1765 = vlaneseq
        %v1766 = vshrl.u32 %v1765, 7
        %v1767 = vsub.s32 0, %v1766
        %v1768 = vrot.slane %v1763, %v1767
        %v1770 = vpack.i.b16 %v1177, %v1177
        %v1772 = vlaneseq
        %v1773 = vshrl.u32 %v1772, 7
        %v1774 = vsub.s32 0, %v1773
        %v1775 = vrot.slane %v1770, %v1774
        %v1777 = vpack.i.b16 %v1181, %v1181
        %v1779 = vlaneseq
        %v1780 = vshrl.u32 %v1779, 7
        %v1781 = vsub.s32 0, %v1780
        %v1782 = vrot.slane %v1777, %v1781
        %v1784 = vpack.i.b16 %v1185, %v1185
        %v1786 = vlaneseq
        %v1787 = vshrl.u32 %v1786, 7
        %v1788 = vsub.s32 0, %v1787
        %v1789 = vrot.slane %v1784, %v1788
        %v1791 = vpack.i.b16 %v1189, %v1189
        %v1793 = vlaneseq
        %v1794 = vshrl.u32 %v1793, 7
        %v1795 = vsub.s32 0, %v1794
        %v1796 = vrot.slane %v1791, %v1795
        %v1798 = vpack.i.b16 %v1193, %v1193
        %v1800 = vlaneseq
        %v1801 = vshrl.u32 %v1800, 7
        %v1802 = vsub.s32 0, %v1801
        %v1803 = vrot.slane %v1798, %v1802
        %v1805 = vpack.i.b16 %v1197, %v1197
        %v1807 = vlaneseq
        %v1808 = vshrl.u32 %v1807, 7
        %v1809 = vsub.s32 0, %v1808
        %v1810 = vrot.slane %v1805, %v1809
        %v1812 = vpack.i.b16 %v1201, %v1201
        %v1814 = vlaneseq
        %v1815 = vshrl.u32 %v1814, 7
        %v1816 = vsub.s32 0, %v1815
        %v1817 = vrot.slane %v1812, %v1816
        %v1819 = vpack.i.b16 %v1205, %v1205
        %v1821 = vlaneseq
        %v1822 = vshrl.u32 %v1821, 7
        %v1823 = vsub.s32 0, %v1822
        %v1824 = vrot.slane %v1819, %v1823
        %v1826 = vpack.i.b16 %v1209, %v1209
        %v1828 = vlaneseq
        %v1829 = vshrl.u32 %v1828, 7
        %v1830 = vsub.s32 0, %v1829
        %v1831 = vrot.slane %v1826, %v1830
        %v1833 = vpack.i.b16 %v1213, %v1213
        %v1835 = vlaneseq
        %v1836 = vshrl.u32 %v1835, 7
        %v1837 = vsub.s32 0, %v1836
        %v1838 = vrot.slane %v1833, %v1837
        %v1840 = vpack.i.b16 %v1217, %v1217
        %v1842 = vlaneseq
        %v1843 = vshrl.u32 %v1842, 7
        %v1844 = vsub.s32 0, %v1843
        %v1845 = vrot.slane %v1840, %v1844
        %v1847 = vpack.i.b16 %v1221, %v1221
        %v1849 = vlaneseq
        %v1850 = vshrl.u32 %v1849, 7
        %v1851 = vsub.s32 0, %v1850
        %v1852 = vrot.slane %v1847, %v1851
        %v1854 = vpack.i.b16 %v1225, %v1225
        %v1856 = vlaneseq
        %v1857 = vshrl.u32 %v1856, 7
        %v1858 = vsub.s32 0, %v1857
        %v1859 = vrot.slane %v1854, %v1858
        %v1861 = vpack.i.b16 %v1229, %v1229
        %v1863 = vlaneseq
        %v1864 = vshrl.u32 %v1863, 7
        %v1865 = vsub.s32 0, %v1864
        %v1866 = vrot.slane %v1861, %v1865
        %v1868 = vpack.i.b16 %v1233, %v1233
        %v1870 = vlaneseq
        %v1871 = vshrl.u32 %v1870, 7
        %v1872 = vsub.s32 0, %v1871
        %v1873 = vrot.slane %v1868, %v1872
        %v1875 = vpack.i.b16 %v1237, %v1237
        %v1877 = vlaneseq
        %v1878 = vshrl.u32 %v1877, 7
        %v1879 = vsub.s32 0, %v1878
        %v1880 = vrot.slane %v1875, %v1879
        %v1882 = vpack.i.b16 %v1241, %v1241
        %v1884 = vlaneseq
        %v1885 = vshrl.u32 %v1884, 7
        %v1886 = vsub.s32 0, %v1885
        %v1887 = vrot.slane %v1882, %v1886
        %v1889 = vpack.i.b16 %v1245, %v1245
        %v1891 = vlaneseq
        %v1892 = vshrl.u32 %v1891, 7
        %v1893 = vsub.s32 0, %v1892
        %v1894 = vrot.slane %v1889, %v1893
        %v1896 = vpack.i.b16 %v1249, %v1249
        %v1898 = vlaneseq
        %v1899 = vshrl.u32 %v1898, 7
        %v1900 = vsub.s32 0, %v1899
        %v1901 = vrot.slane %v1896, %v1900
        %v1903 = vpack.i.b16 %v1253, %v1253
        %v1905 = vlaneseq
        %v1906 = vshrl.u32 %v1905, 7
        %v1907 = vsub.s32 0, %v1906
        %v1908 = vrot.slane %v1903, %v1907
        %v1910 = vpack.i.b16 %v1257, %v1257
        %v1912 = vlaneseq
        %v1913 = vshrl.u32 %v1912, 7
        %v1914 = vsub.s32 0, %v1913
        %v1915 = vrot.slane %v1910, %v1914
        %v1917 = vpack.i.b16 %v1261, %v1261
        %v1919 = vlaneseq
        %v1920 = vshrl.u32 %v1919, 7
        %v1921 = vsub.s32 0, %v1920
        %v1922 = vrot.slane %v1917, %v1921
        %v1924 = vpack.i.b16 %v1265, %v1265
        %v1926 = vlaneseq
        %v1927 = vshrl.u32 %v1926, 7
        %v1928 = vsub.s32 0, %v1927
        %v1929 = vrot.slane %v1924, %v1928
        %v1931 = vpack.i.b16 %v1269, %v1269
        %v1933 = vlaneseq
        %v1934 = vshrl.u32 %v1933, 7
        %v1935 = vsub.s32 0, %v1934
        %v1936 = vrot.slane %v1931, %v1935
        %v1938 = vpack.i.b16 %v1273, %v1273
        %v1940 = vlaneseq
        %v1941 = vshrl.u32 %v1940, 7
        %v1942 = vsub.s32 0, %v1941
        %v1943 = vrot.slane %v1938, %v1942
        %v1945 = vpack.i.b16 %v1277, %v1277
        %v1947 = vlaneseq
        %v1948 = vshrl.u32 %v1947, 7
        %v1949 = vsub.s32 0, %v1948
        %v1950 = vrot.slane %v1945, %v1949
        %v1952 = vpack.i.b16 %v1281, %v1281
        %v1954 = vlaneseq
        %v1955 = vshrl.u32 %v1954, 7
        %v1956 = vsub.s32 0, %v1955
        %v1957 = vrot.slane %v1952, %v1956
        %v1959 = vpack.i.b16 %v1285, %v1285
        %v1961 = vlaneseq
        %v1962 = vshrl.u32 %v1961, 7
        %v1963 = vsub.s32 0, %v1962
        %v1964 = vrot.slane %v1959, %v1963
        %v1966 = vpack.i.b16 %v1289, %v1289
        %v1968 = vlaneseq
        %v1969 = vshrl.u32 %v1968, 7
        %v1970 = vsub.s32 0, %v1969
        %v1971 = vrot.slane %v1966, %v1970
        %v1973 = vpack.i.b16 %v1293, %v1293
        %v1975 = vlaneseq
        %v1976 = vshrl.u32 %v1975, 7
        %v1977 = vsub.s32 0, %v1976
        %v1978 = vrot.slane %v1973, %v1977
        %v1980 = vpack.i.b16 %v1297, %v1297
        %v1982 = vlaneseq
        %v1983 = vshrl.u32 %v1982, 7
        %v1984 = vsub.s32 0, %v1983
        %v1985 = vrot.slane %v1980, %v1984
        %v1987 = vpack.i.b16 %v1301, %v1301
        %v1989 = vlaneseq
        %v1990 = vshrl.u32 %v1989, 7
        %v1991 = vsub.s32 0, %v1990
        %v1992 = vrot.slane %v1987, %v1991
        %v1994 = vpack.i.b16 %v1305, %v1305
        %v1996 = vlaneseq
        %v1997 = vshrl.u32 %v1996, 7
        %v1998 = vsub.s32 0, %v1997
        %v1999 = vrot.slane %v1994, %v1998
        %v2001 = vpack.i.b16 %v1309, %v1309
        %v2003 = vlaneseq
        %v2004 = vshrl.u32 %v2003, 7
        %v2005 = vsub.s32 0, %v2004
        %v2006 = vrot.slane %v2001, %v2005
        %v2008 = vpack.i.b16 %v1313, %v1313
        %v2010 = vlaneseq
        %v2011 = vshrl.u32 %v2010, 7
        %v2012 = vsub.s32 0, %v2011
        %v2013 = vrot.slane %v2008, %v2012
        %v2014 = vunpack.c.l.bf16 %v236
        %v2015 = vunpack.c.l.bf16 %v237
        %v2016 = vunpack.c.l.bf16 %v238
        %v2017 = vunpack.c.l.bf16 %v239
        %v2018 = vunpack.c.l.bf16 %v240
        %v2019 = vunpack.c.l.bf16 %v241
        %v2020 = vunpack.c.l.bf16 %v242
        %v2021 = vunpack.c.l.bf16 %v243
        %v2022 = vunpack.c.l.bf16 %v244
        %v2023 = vunpack.c.l.bf16 %v245
        %v2024 = vunpack.c.l.bf16 %v246
        %v2025 = vunpack.c.l.bf16 %v247
        %v2026 = vunpack.c.l.bf16 %v248
        %v2027 = vunpack.c.l.bf16 %v249
        %v2028 = vunpack.c.l.bf16 %v250
        %v2029 = vunpack.c.l.bf16 %v251
        %v2030 = vunpack.c.l.bf16 %v252
        %v2031 = vunpack.c.l.bf16 %v253
        %v2032 = vunpack.c.l.bf16 %v254
        %v2033 = vunpack.c.l.bf16 %v255
        %v2034 = vunpack.c.l.bf16 %v256
        %v2035 = vunpack.c.l.bf16 %v257
        %v2036 = vunpack.c.l.bf16 %v258
        %v2037 = vunpack.c.l.bf16 %v259
        %v2038 = vunpack.c.l.bf16 %v260
        %v2039 = vunpack.c.l.bf16 %v261
        %v2040 = vunpack.c.l.bf16 %v262
        %v2041 = vunpack.c.l.bf16 %v263
        %v2042 = vunpack.c.l.bf16 %v264
        %v2043 = vunpack.c.l.bf16 %v265
        %v2044 = vunpack.c.l.bf16 %v266
        %v2045 = vunpack.c.l.bf16 %v267
        %v2046 = vunpack.c.l.bf16 %v268
        %v2047 = vunpack.c.l.bf16 %v269
        %v2048 = vunpack.c.l.bf16 %v270
        %v2049 = vunpack.c.l.bf16 %v271
        %v2050 = vunpack.c.l.bf16 %v272
        %v2051 = vunpack.c.l.bf16 %v273
        %v2052 = vunpack.c.l.bf16 %v274
        %v2053 = vunpack.c.l.bf16 %v275
        %v2054 = vunpack.c.l.bf16 %v276
        %v2055 = vunpack.c.l.bf16 %v277
        %v2056 = vunpack.c.l.bf16 %v278
        %v2057 = vunpack.c.l.bf16 %v279
        %v2058 = vunpack.c.l.bf16 %v280
        %v2059 = vunpack.c.l.bf16 %v281
        %v2060 = vunpack.c.l.bf16 %v282
        %v2061 = vunpack.c.l.bf16 %v283
        %v2062 = vunpack.c.l.bf16 %v284
        %v2063 = vunpack.c.l.bf16 %v285
        %v2064 = vunpack.c.l.bf16 %v286
        %v2065 = vunpack.c.l.bf16 %v287
        %v2066 = vunpack.c.l.bf16 %v288
        %v2067 = vunpack.c.l.bf16 %v289
        %v2068 = vunpack.c.l.bf16 %v1320
        %v2069 = vunpack.c.l.bf16 %v1327
        %v2070 = vunpack.c.l.bf16 %v1334
        %v2071 = vunpack.c.l.bf16 %v1341
        %v2072 = vunpack.c.l.bf16 %v1348
        %v2073 = vunpack.c.l.bf16 %v1355
        %v2074 = vunpack.c.l.bf16 %v1362
        %v2075 = vunpack.c.l.bf16 %v1369
        %v2076 = vunpack.c.l.bf16 %v1376
        %v2077 = vunpack.c.l.bf16 %v1383
        %v2078 = vunpack.c.l.bf16 %v1390
        %v2079 = vunpack.c.l.bf16 %v1397
        %v2080 = vunpack.c.l.bf16 %v1404
        %v2081 = vunpack.c.l.bf16 %v1411
        %v2082 = vunpack.c.l.bf16 %v1418
        %v2083 = vunpack.c.l.bf16 %v1425
        %v2084 = vunpack.c.l.bf16 %v1432
        %v2085 = vunpack.c.l.bf16 %v1439
        %v2086 = vunpack.c.l.bf16 %v1446
        %v2087 = vunpack.c.l.bf16 %v1453
        %v2088 = vunpack.c.l.bf16 %v1460
        %v2089 = vunpack.c.l.bf16 %v1467
        %v2090 = vunpack.c.l.bf16 %v1474
        %v2091 = vunpack.c.l.bf16 %v1481
        %v2092 = vunpack.c.l.bf16 %v1488
        %v2093 = vunpack.c.l.bf16 %v1495
        %v2094 = vunpack.c.l.bf16 %v1502
        %v2095 = vunpack.c.l.bf16 %v1509
        %v2096 = vunpack.c.l.bf16 %v1516
        %v2097 = vunpack.c.l.bf16 %v1523
        %v2098 = vunpack.c.l.bf16 %v1530
        %v2099 = vunpack.c.l.bf16 %v1537
        %v2100 = vunpack.c.l.bf16 %v1544
        %v2101 = vunpack.c.l.bf16 %v1551
        %v2102 = vunpack.c.l.bf16 %v1558
        %v2103 = vunpack.c.l.bf16 %v1565
        %v2104 = vunpack.c.l.bf16 %v1572
        %v2105 = vunpack.c.l.bf16 %v1579
        %v2106 = vunpack.c.l.bf16 %v1586
        %v2107 = vunpack.c.l.bf16 %v1593
        %v2108 = vunpack.c.l.bf16 %v1600
        %v2109 = vunpack.c.l.bf16 %v1607
        %v2110 = vunpack.c.l.bf16 %v1614
        %v2111 = vunpack.c.l.bf16 %v1621
        %v2112 = vunpack.c.l.bf16 %v1628
        %v2113 = vunpack.c.l.bf16 %v1635
        %v2114 = vunpack.c.l.bf16 %v1642
        %v2115 = vunpack.c.l.bf16 %v1649
        %v2116 = vunpack.c.l.bf16 %v1656
        %v2117 = vunpack.c.l.bf16 %v1663
        %v2118 = vunpack.c.l.bf16 %v1670
        %v2119 = vunpack.c.l.bf16 %v1677
        %v2120 = vunpack.c.l.bf16 %v1684
        %v2121 = vunpack.c.l.bf16 %v1691
        %v2122 = vunpack.c.l.bf16 %v1698
        %v2123 = vunpack.c.l.bf16 %v1705
        %v2124 = vunpack.c.l.bf16 %v1712
        %v2125 = vunpack.c.l.bf16 %v1719
        %v2126 = vunpack.c.l.bf16 %v1726
        %v2127 = vunpack.c.l.bf16 %v1733
        %v2128 = vunpack.c.l.bf16 %v1740
        %v2129 = vunpack.c.l.bf16 %v1747
        %v2130 = vunpack.c.l.bf16 %v1754
        %v2131 = vunpack.c.l.bf16 %v1761
        %v2132 = vunpack.c.l.bf16 %v1768
        %v2133 = vunpack.c.l.bf16 %v1775
        %v2134 = vunpack.c.l.bf16 %v1782
        %v2135 = vunpack.c.l.bf16 %v1789
        %v2136 = vunpack.c.l.bf16 %v1796
        %v2137 = vunpack.c.l.bf16 %v1803
        %v2138 = vunpack.c.l.bf16 %v1810
        %v2139 = vunpack.c.l.bf16 %v1817
        %v2140 = vunpack.c.l.bf16 %v1824
        %v2141 = vunpack.c.l.bf16 %v1831
        %v2142 = vunpack.c.l.bf16 %v1838
        %v2143 = vunpack.c.l.bf16 %v1845
        %v2144 = vunpack.c.l.bf16 %v1852
        %v2145 = vunpack.c.l.bf16 %v1859
        %v2146 = vunpack.c.l.bf16 %v1866
        %v2147 = vunpack.c.l.bf16 %v1873
        %v2148 = vunpack.c.l.bf16 %v1880
        %v2149 = vunpack.c.l.bf16 %v1887
        %v2150 = vunpack.c.l.bf16 %v1894
        %v2151 = vunpack.c.l.bf16 %v1901
        %v2152 = vunpack.c.l.bf16 %v1908
        %v2153 = vunpack.c.l.bf16 %v1915
        %v2154 = vunpack.c.l.bf16 %v1922
        %v2155 = vunpack.c.l.bf16 %v1929
        %v2156 = vunpack.c.l.bf16 %v1936
        %v2157 = vunpack.c.l.bf16 %v1943
        %v2158 = vunpack.c.l.bf16 %v1950
        %v2159 = vunpack.c.l.bf16 %v1957
        %v2160 = vunpack.c.l.bf16 %v1964
        %v2161 = vunpack.c.l.bf16 %v1971
        %v2162 = vunpack.c.l.bf16 %v1978
        %v2163 = vunpack.c.l.bf16 %v1985
        %v2164 = vunpack.c.l.bf16 %v1992
        %v2165 = vunpack.c.l.bf16 %v1999
        %v2166 = vunpack.c.l.bf16 %v2006
        %v2167 = vunpack.c.l.bf16 %v2013
        %v2268 = vcombine.low %v2068, %v2069
        %v2269 = vcombine.low %v2070, %v2071
        %v2271 = vunpack.c.l.s4 1983009808
        %v2272 = vunpack.c.0.s8 %v2271
        %v2273 = vlaneseq
        %v2274 = vshrl.u32 %v2273, 7
        %v2275 = vsub.s32 %v2272, %v2274
        %v2276 = vrot.slane %v2268, %v2275
        %v2278 = vunpack.c.l.s4 1983009808
        %v2279 = vunpack.c.0.s8 %v2278
        %v2280 = vlaneseq
        %v2281 = vshrl.u32 %v2280, 7
        %v2282 = vsub.s32 %v2279, %v2281
        %v2283 = vrot.slane %v2269, %v2282
        %v2284 = vcombine.low %v2276, %v2283
        %v2285 = vcombine.low %v2072, %v2073
        %v2286 = vcombine.low %v2074, %v2075
        %v2288 = vunpack.c.l.s4 1983009808
        %v2289 = vunpack.c.0.s8 %v2288
        %v2290 = vlaneseq
        %v2291 = vshrl.u32 %v2290, 7
        %v2292 = vsub.s32 %v2289, %v2291
        %v2293 = vrot.slane %v2285, %v2292
        %v2295 = vunpack.c.l.s4 1983009808
        %v2296 = vunpack.c.0.s8 %v2295
        %v2297 = vlaneseq
        %v2298 = vshrl.u32 %v2297, 7
        %v2299 = vsub.s32 %v2296, %v2298
        %v2300 = vrot.slane %v2286, %v2299
        %v2301 = vcombine.low %v2293, %v2300
        %v2302 = vcombine.low %v2076, %v2077
        %v2304 = vunpack.c.l.s4 1983009808
        %v2305 = vunpack.c.0.s8 %v2304
        %v2306 = vlaneseq
        %v2307 = vshrl.u32 %v2306, 7
        %v2308 = vsub.s32 %v2305, %v2307
        %v2309 = vrot.slane %v2302, %v2308
        %v2310 = vcombine.low %v2078, %v2079
        %v2311 = vcombine.low %v2080, %v2081
        %v2313 = vunpack.c.l.s4 1983009808
        %v2314 = vunpack.c.0.s8 %v2313
        %v2315 = vlaneseq
        %v2316 = vshrl.u32 %v2315, 7
        %v2317 = vsub.s32 %v2314, %v2316
        %v2318 = vrot.slane %v2310, %v2317
        %v2320 = vunpack.c.l.s4 1983009808
        %v2321 = vunpack.c.0.s8 %v2320
        %v2322 = vlaneseq
        %v2323 = vshrl.u32 %v2322, 7
        %v2324 = vsub.s32 %v2321, %v2323
        %v2325 = vrot.slane %v2311, %v2324
        %v2326 = vcombine.low %v2318, %v2325
        %v2327 = vcombine.low %v2082, %v2083
        %v2328 = vcombine.low %v2084, %v2085
        %v2330 = vunpack.c.l.s4 1983009808
        %v2331 = vunpack.c.0.s8 %v2330
        %v2332 = vlaneseq
        %v2333 = vshrl.u32 %v2332, 7
        %v2334 = vsub.s32 %v2331, %v2333
        %v2335 = vrot.slane %v2327, %v2334
        %v2337 = vunpack.c.l.s4 1983009808
        %v2338 = vunpack.c.0.s8 %v2337
        %v2339 = vlaneseq
        %v2340 = vshrl.u32 %v2339, 7
        %v2341 = vsub.s32 %v2338, %v2340
        %v2342 = vrot.slane %v2328, %v2341
        %v2343 = vcombine.low %v2335, %v2342
        %v2344 = vcombine.low %v2086, %v2087
        %v2346 = vunpack.c.l.s4 1983009808
        %v2347 = vunpack.c.0.s8 %v2346
        %v2348 = vlaneseq
        %v2349 = vshrl.u32 %v2348, 7
        %v2350 = vsub.s32 %v2347, %v2349
        %v2351 = vrot.slane %v2344, %v2350
        %v2352 = vcombine.low %v2088, %v2089
        %v2353 = vcombine.low %v2090, %v2091
        %v2355 = vunpack.c.l.s4 1983009808
        %v2356 = vunpack.c.0.s8 %v2355
        %v2357 = vlaneseq
        %v2358 = vshrl.u32 %v2357, 7
        %v2359 = vsub.s32 %v2356, %v2358
        %v2360 = vrot.slane %v2352, %v2359
        %v2362 = vunpack.c.l.s4 1983009808
        %v2363 = vunpack.c.0.s8 %v2362
        %v2364 = vlaneseq
        %v2365 = vshrl.u32 %v2364, 7
        %v2366 = vsub.s32 %v2363, %v2365
        %v2367 = vrot.slane %v2353, %v2366
        %v2368 = vcombine.low %v2360, %v2367
        %v2369 = vcombine.low %v2092, %v2093
        %v2370 = vcombine.low %v2094, %v2095
        %v2372 = vunpack.c.l.s4 1983009808
        %v2373 = vunpack.c.0.s8 %v2372
        %v2374 = vlaneseq
        %v2375 = vshrl.u32 %v2374, 7
        %v2376 = vsub.s32 %v2373, %v2375
        %v2377 = vrot.slane %v2369, %v2376
        %v2379 = vunpack.c.l.s4 1983009808
        %v2380 = vunpack.c.0.s8 %v2379
        %v2381 = vlaneseq
        %v2382 = vshrl.u32 %v2381, 7
        %v2383 = vsub.s32 %v2380, %v2382
        %v2384 = vrot.slane %v2370, %v2383
        %v2385 = vcombine.low %v2377, %v2384
        %v2386 = vcombine.low %v2096, %v2097
        %v2388 = vunpack.c.l.s4 1983009808
        %v2389 = vunpack.c.0.s8 %v2388
        %v2390 = vlaneseq
        %v2391 = vshrl.u32 %v2390, 7
        %v2392 = vsub.s32 %v2389, %v2391
        %v2393 = vrot.slane %v2386, %v2392
        %v2394 = vcombine.low %v2098, %v2099
        %v2395 = vcombine.low %v2100, %v2101
        %v2397 = vunpack.c.l.s4 1983009808
        %v2398 = vunpack.c.0.s8 %v2397
        %v2399 = vlaneseq
        %v2400 = vshrl.u32 %v2399, 7
        %v2401 = vsub.s32 %v2398, %v2400
        %v2402 = vrot.slane %v2394, %v2401
        %v2404 = vunpack.c.l.s4 1983009808
        %v2405 = vunpack.c.0.s8 %v2404
        %v2406 = vlaneseq
        %v2407 = vshrl.u32 %v2406, 7
        %v2408 = vsub.s32 %v2405, %v2407
        %v2409 = vrot.slane %v2395, %v2408
        %v2410 = vcombine.low %v2402, %v2409
        %v2411 = vcombine.low %v2102, %v2103
        %v2412 = vcombine.low %v2104, %v2105
        %v2414 = vunpack.c.l.s4 1983009808
        %v2415 = vunpack.c.0.s8 %v2414
        %v2416 = vlaneseq
        %v2417 = vshrl.u32 %v2416, 7
        %v2418 = vsub.s32 %v2415, %v2417
        %v2419 = vrot.slane %v2411, %v2418
        %v2421 = vunpack.c.l.s4 1983009808
        %v2422 = vunpack.c.0.s8 %v2421
        %v2423 = vlaneseq
        %v2424 = vshrl.u32 %v2423, 7
        %v2425 = vsub.s32 %v2422, %v2424
        %v2426 = vrot.slane %v2412, %v2425
        %v2427 = vcombine.low %v2419, %v2426
        %v2428 = vcombine.low %v2106, %v2107
        %v2430 = vunpack.c.l.s4 1983009808
        %v2431 = vunpack.c.0.s8 %v2430
        %v2432 = vlaneseq
        %v2433 = vshrl.u32 %v2432, 7
        %v2434 = vsub.s32 %v2431, %v2433
        %v2435 = vrot.slane %v2428, %v2434
        %v2436 = vcombine.low %v2108, %v2109
        %v2437 = vcombine.low %v2110, %v2111
        %v2439 = vunpack.c.l.s4 1983009808
        %v2440 = vunpack.c.0.s8 %v2439
        %v2441 = vlaneseq
        %v2442 = vshrl.u32 %v2441, 7
        %v2443 = vsub.s32 %v2440, %v2442
        %v2444 = vrot.slane %v2436, %v2443
        %v2446 = vunpack.c.l.s4 1983009808
        %v2447 = vunpack.c.0.s8 %v2446
        %v2448 = vlaneseq
        %v2449 = vshrl.u32 %v2448, 7
        %v2450 = vsub.s32 %v2447, %v2449
        %v2451 = vrot.slane %v2437, %v2450
        %v2452 = vcombine.low %v2444, %v2451
        %v2453 = vcombine.low %v2112, %v2113
        %v2454 = vcombine.low %v2114, %v2115
        %v2456 = vunpack.c.l.s4 1983009808
        %v2457 = vunpack.c.0.s8 %v2456
        %v2458 = vlaneseq
        %v2459 = vshrl.u32 %v2458, 7
        %v2460 = vsub.s32 %v2457, %v2459
        %v2461 = vrot.slane %v2453, %v2460
        %v2463 = vunpack.c.l.s4 1983009808
        %v2464 = vunpack.c.0.s8 %v2463
        %v2465 = vlaneseq
        %v2466 = vshrl.u32 %v2465, 7
        %v2467 = vsub.s32 %v2464, %v2466
        %v2468 = vrot.slane %v2454, %v2467
        %v2469 = vcombine.low %v2461, %v2468
        %v2470 = vcombine.low %v2116, %v2117
        %v2472 = vunpack.c.l.s4 1983009808
        %v2473 = vunpack.c.0.s8 %v2472
        %v2474 = vlaneseq
        %v2475 = vshrl.u32 %v2474, 7
        %v2476 = vsub.s32 %v2473, %v2475
        %v2477 = vrot.slane %v2470, %v2476
        %v2478 = vcombine.low %v2118, %v2119
        %v2479 = vcombine.low %v2120, %v2121
        %v2481 = vunpack.c.l.s4 1983009808
        %v2482 = vunpack.c.0.s8 %v2481
        %v2483 = vlaneseq
        %v2484 = vshrl.u32 %v2483, 7
        %v2485 = vsub.s32 %v2482, %v2484
        %v2486 = vrot.slane %v2478, %v2485
        %v2488 = vunpack.c.l.s4 1983009808
        %v2489 = vunpack.c.0.s8 %v2488
        %v2490 = vlaneseq
        %v2491 = vshrl.u32 %v2490, 7
        %v2492 = vsub.s32 %v2489, %v2491
        %v2493 = vrot.slane %v2479, %v2492
        %v2494 = vcombine.low %v2486, %v2493
        %v2495 = vcombine.low %v2122, %v2123
        %v2496 = vcombine.low %v2124, %v2125
        %v2498 = vunpack.c.l.s4 1983009808
        %v2499 = vunpack.c.0.s8 %v2498
        %v2500 = vlaneseq
        %v2501 = vshrl.u32 %v2500, 7
        %v2502 = vsub.s32 %v2499, %v2501
        %v2503 = vrot.slane %v2495, %v2502
        %v2505 = vunpack.c.l.s4 1983009808
        %v2506 = vunpack.c.0.s8 %v2505
        %v2507 = vlaneseq
        %v2508 = vshrl.u32 %v2507, 7
        %v2509 = vsub.s32 %v2506, %v2508
        %v2510 = vrot.slane %v2496, %v2509
        %v2511 = vcombine.low %v2503, %v2510
        %v2512 = vcombine.low %v2126, %v2127
        %v2514 = vunpack.c.l.s4 1983009808
        %v2515 = vunpack.c.0.s8 %v2514
        %v2516 = vlaneseq
        %v2517 = vshrl.u32 %v2516, 7
        %v2518 = vsub.s32 %v2515, %v2517
        %v2519 = vrot.slane %v2512, %v2518
        %v2520 = vcombine.low %v2128, %v2129
        %v2521 = vcombine.low %v2130, %v2131
        %v2523 = vunpack.c.l.s4 1983009808
        %v2524 = vunpack.c.0.s8 %v2523
        %v2525 = vlaneseq
        %v2526 = vshrl.u32 %v2525, 7
        %v2527 = vsub.s32 %v2524, %v2526
        %v2528 = vrot.slane %v2520, %v2527
        %v2530 = vunpack.c.l.s4 1983009808
        %v2531 = vunpack.c.0.s8 %v2530
        %v2532 = vlaneseq
        %v2533 = vshrl.u32 %v2532, 7
        %v2534 = vsub.s32 %v2531, %v2533
        %v2535 = vrot.slane %v2521, %v2534
        %v2536 = vcombine.low %v2528, %v2535
        %v2537 = vcombine.low %v2132, %v2133
        %v2538 = vcombine.low %v2134, %v2135
        %v2540 = vunpack.c.l.s4 1983009808
        %v2541 = vunpack.c.0.s8 %v2540
        %v2542 = vlaneseq
        %v2543 = vshrl.u32 %v2542, 7
        %v2544 = vsub.s32 %v2541, %v2543
        %v2545 = vrot.slane %v2537, %v2544
        %v2547 = vunpack.c.l.s4 1983009808
        %v2548 = vunpack.c.0.s8 %v2547
        %v2549 = vlaneseq
        %v2550 = vshrl.u32 %v2549, 7
        %v2551 = vsub.s32 %v2548, %v2550
        %v2552 = vrot.slane %v2538, %v2551
        %v2553 = vcombine.low %v2545, %v2552
        %v2554 = vcombine.low %v2136, %v2137
        %v2556 = vunpack.c.l.s4 1983009808
        %v2557 = vunpack.c.0.s8 %v2556
        %v2558 = vlaneseq
        %v2559 = vshrl.u32 %v2558, 7
        %v2560 = vsub.s32 %v2557, %v2559
        %v2561 = vrot.slane %v2554, %v2560
        %v2562 = vcombine.low %v2138, %v2139
        %v2563 = vcombine.low %v2140, %v2141
        %v2565 = vunpack.c.l.s4 1983009808
        %v2566 = vunpack.c.0.s8 %v2565
        %v2567 = vlaneseq
        %v2568 = vshrl.u32 %v2567, 7
        %v2569 = vsub.s32 %v2566, %v2568
        %v2570 = vrot.slane %v2562, %v2569
        %v2572 = vunpack.c.l.s4 1983009808
        %v2573 = vunpack.c.0.s8 %v2572
        %v2574 = vlaneseq
        %v2575 = vshrl.u32 %v2574, 7
        %v2576 = vsub.s32 %v2573, %v2575
        %v2577 = vrot.slane %v2563, %v2576
        %v2578 = vcombine.low %v2570, %v2577
        %v2579 = vcombine.low %v2142, %v2143
        %v2580 = vcombine.low %v2144, %v2145
        %v2582 = vunpack.c.l.s4 1983009808
        %v2583 = vunpack.c.0.s8 %v2582
        %v2584 = vlaneseq
        %v2585 = vshrl.u32 %v2584, 7
        %v2586 = vsub.s32 %v2583, %v2585
        %v2587 = vrot.slane %v2579, %v2586
        %v2589 = vunpack.c.l.s4 1983009808
        %v2590 = vunpack.c.0.s8 %v2589
        %v2591 = vlaneseq
        %v2592 = vshrl.u32 %v2591, 7
        %v2593 = vsub.s32 %v2590, %v2592
        %v2594 = vrot.slane %v2580, %v2593
        %v2595 = vcombine.low %v2587, %v2594
        %v2596 = vcombine.low %v2146, %v2147
        %v2598 = vunpack.c.l.s4 1983009808
        %v2599 = vunpack.c.0.s8 %v2598
        %v2600 = vlaneseq
        %v2601 = vshrl.u32 %v2600, 7
        %v2602 = vsub.s32 %v2599, %v2601
        %v2603 = vrot.slane %v2596, %v2602
        %v2604 = vcombine.low %v2148, %v2149
        %v2605 = vcombine.low %v2150, %v2151
        %v2607 = vunpack.c.l.s4 1983009808
        %v2608 = vunpack.c.0.s8 %v2607
        %v2609 = vlaneseq
        %v2610 = vshrl.u32 %v2609, 7
        %v2611 = vsub.s32 %v2608, %v2610
        %v2612 = vrot.slane %v2604, %v2611
        %v2614 = vunpack.c.l.s4 1983009808
        %v2615 = vunpack.c.0.s8 %v2614
        %v2616 = vlaneseq
        %v2617 = vshrl.u32 %v2616, 7
        %v2618 = vsub.s32 %v2615, %v2617
        %v2619 = vrot.slane %v2605, %v2618
        %v2620 = vcombine.low %v2612, %v2619
        %v2621 = vcombine.low %v2152, %v2153
        %v2622 = vcombine.low %v2154, %v2155
        %v2624 = vunpack.c.l.s4 1983009808
        %v2625 = vunpack.c.0.s8 %v2624
        %v2626 = vlaneseq
        %v2627 = vshrl.u32 %v2626, 7
        %v2628 = vsub.s32 %v2625, %v2627
        %v2629 = vrot.slane %v2621, %v2628
        %v2631 = vunpack.c.l.s4 1983009808
        %v2632 = vunpack.c.0.s8 %v2631
        %v2633 = vlaneseq
        %v2634 = vshrl.u32 %v2633, 7
        %v2635 = vsub.s32 %v2632, %v2634
        %v2636 = vrot.slane %v2622, %v2635
        %v2637 = vcombine.low %v2629, %v2636
        %v2638 = vcombine.low %v2156, %v2157
        %v2640 = vunpack.c.l.s4 1983009808
        %v2641 = vunpack.c.0.s8 %v2640
        %v2642 = vlaneseq
        %v2643 = vshrl.u32 %v2642, 7
        %v2644 = vsub.s32 %v2641, %v2643
        %v2645 = vrot.slane %v2638, %v2644
        %v2646 = vcombine.low %v2158, %v2159
        %v2647 = vcombine.low %v2160, %v2161
        %v2649 = vunpack.c.l.s4 1983009808
        %v2650 = vunpack.c.0.s8 %v2649
        %v2651 = vlaneseq
        %v2652 = vshrl.u32 %v2651, 7
        %v2653 = vsub.s32 %v2650, %v2652
        %v2654 = vrot.slane %v2646, %v2653
        %v2656 = vunpack.c.l.s4 1983009808
        %v2657 = vunpack.c.0.s8 %v2656
        %v2658 = vlaneseq
        %v2659 = vshrl.u32 %v2658, 7
        %v2660 = vsub.s32 %v2657, %v2659
        %v2661 = vrot.slane %v2647, %v2660
        %v2662 = vcombine.low %v2654, %v2661
        %v2663 = vcombine.low %v2162, %v2163
        %v2664 = vcombine.low %v2164, %v2165
        %v2666 = vunpack.c.l.s4 1983009808
        %v2667 = vunpack.c.0.s8 %v2666
        %v2668 = vlaneseq
        %v2669 = vshrl.u32 %v2668, 7
        %v2670 = vsub.s32 %v2667, %v2669
        %v2671 = vrot.slane %v2663, %v2670
        %v2673 = vunpack.c.l.s4 1983009808
        %v2674 = vunpack.c.0.s8 %v2673
        %v2675 = vlaneseq
        %v2676 = vshrl.u32 %v2675, 7
        %v2677 = vsub.s32 %v2674, %v2676
        %v2678 = vrot.slane %v2664, %v2677
        %v2679 = vcombine.low %v2671, %v2678
        %v2680 = vcombine.low %v2166, %v2167
        %v2682 = vunpack.c.l.s4 1983009808
        %v2683 = vunpack.c.0.s8 %v2682
        %v2684 = vlaneseq
        %v2685 = vshrl.u32 %v2684, 7
        %v2686 = vsub.s32 %v2683, %v2685
        %v2687 = vrot.slane %v2680, %v2686
        %vm2688 = vcmask 1046528
        %v2689 = vrot.slane %v2284, 1
        %v2690 = vrot.slane %v2301, 1
        %v2691 = vsel %vm2688, %v2689, %v2690
        %v2692 = vrot.slane %v2309, 1
        %v2693 = vsel %vm2688, %v2690, %v2692
        %v2694 = vrot.slane %v2326, 1
        %v2695 = vrot.slane %v2343, 1
        %v2696 = vsel %vm2688, %v2694, %v2695
        %v2697 = vrot.slane %v2351, 1
        %v2698 = vsel %vm2688, %v2695, %v2697
        %v2699 = vrot.slane %v2368, 1
        %v2700 = vrot.slane %v2385, 1
        %v2701 = vsel %vm2688, %v2699, %v2700
        %v2702 = vrot.slane %v2393, 1
        %v2703 = vsel %vm2688, %v2700, %v2702
        %v2704 = vrot.slane %v2410, 1
        %v2705 = vrot.slane %v2427, 1
        %v2706 = vsel %vm2688, %v2704, %v2705
        %v2707 = vrot.slane %v2435, 1
        %v2708 = vsel %vm2688, %v2705, %v2707
        %v2709 = vrot.slane %v2452, 1
        %v2710 = vrot.slane %v2469, 1
        %v2711 = vsel %vm2688, %v2709, %v2710
        %v2712 = vrot.slane %v2477, 1
        %v2713 = vsel %vm2688, %v2710, %v2712
        %v2714 = vrot.slane %v2494, 1
        %v2715 = vrot.slane %v2511, 1
        %v2716 = vsel %vm2688, %v2714, %v2715
        %v2717 = vrot.slane %v2519, 1
        %v2718 = vsel %vm2688, %v2715, %v2717
        %v2719 = vrot.slane %v2536, 1
        %v2720 = vrot.slane %v2553, 1
        %v2721 = vsel %vm2688, %v2719, %v2720
        %v2722 = vrot.slane %v2561, 1
        %v2723 = vsel %vm2688, %v2720, %v2722
        %v2724 = vrot.slane %v2578, 1
        %v2725 = vrot.slane %v2595, 1
        %v2726 = vsel %vm2688, %v2724, %v2725
        %v2727 = vrot.slane %v2603, 1
        %v2728 = vsel %vm2688, %v2725, %v2727
        %v2729 = vrot.slane %v2620, 1
        %v2730 = vrot.slane %v2637, 1
        %v2731 = vsel %vm2688, %v2729, %v2730
        %v2732 = vrot.slane %v2645, 1
        %v2733 = vsel %vm2688, %v2730, %v2732
        %v2734 = vrot.slane %v2662, 1
        %v2735 = vrot.slane %v2679, 1
        %v2736 = vsel %vm2688, %v2734, %v2735
        %v2737 = vrot.slane %v2687, 1
        %v2738 = vsel %vm2688, %v2735, %v2737
        %v2769 = vadd.f32 %v2014, %v2691
        %v2770 = vadd.f32 %v2015, %v2693
        %v2771 = vadd.f32 %v2016, %v2692
        %v2772 = vadd.f32 %v2017, %v2696
        %v2773 = vadd.f32 %v2018, %v2698
        %v2774 = vadd.f32 %v2019, %v2697
        %v2775 = vadd.f32 %v2020, %v2696
        %v2776 = vadd.f32 %v2021, %v2698
        %v2777 = vadd.f32 %v2022, %v2697
        %v2778 = vadd.f32 %v2023, %v2701
        %v2779 = vadd.f32 %v2024, %v2703
        %v2780 = vadd.f32 %v2025, %v2702
        %v2781 = vadd.f32 %v2026, %v2701
        %v2782 = vadd.f32 %v2027, %v2703
        %v2783 = vadd.f32 %v2028, %v2702
        %v2784 = vadd.f32 %v2029, %v2706
        %v2785 = vadd.f32 %v2030, %v2708
        %v2786 = vadd.f32 %v2031, %v2707
        %v2787 = vadd.f32 %v2032, %v2706
        %v2788 = vadd.f32 %v2033, %v2708
        %v2789 = vadd.f32 %v2034, %v2707
        %v2790 = vadd.f32 %v2035, %v2711
        %v2791 = vadd.f32 %v2036, %v2713
        %v2792 = vadd.f32 %v2037, %v2712
        %v2793 = vadd.f32 %v2038, %v2711
        %v2794 = vadd.f32 %v2039, %v2713
        %v2795 = vadd.f32 %v2040, %v2712
        %v2796 = vadd.f32 %v2041, %v2716
        %v2797 = vadd.f32 %v2042, %v2718
        %v2798 = vadd.f32 %v2043, %v2717
        %v2799 = vadd.f32 %v2044, %v2716
        %v2800 = vadd.f32 %v2045, %v2718
        %v2801 = vadd.f32 %v2046, %v2717
        %v2802 = vadd.f32 %v2047, %v2721
        %v2803 = vadd.f32 %v2048, %v2723
        %v2804 = vadd.f32 %v2049, %v2722
        %v2805 = vadd.f32 %v2050, %v2721
        %v2806 = vadd.f32 %v2051, %v2723
        %v2807 = vadd.f32 %v2052, %v2722
        %v2808 = vadd.f32 %v2053, %v2726
        %v2809 = vadd.f32 %v2054, %v2728
        %v2810 = vadd.f32 %v2055, %v2727
        %v2811 = vadd.f32 %v2056, %v2726
        %v2812 = vadd.f32 %v2057, %v2728
        %v2813 = vadd.f32 %v2058, %v2727
        %v2814 = vadd.f32 %v2059, %v2731
        %v2815 = vadd.f32 %v2060, %v2733
        %v2816 = vadd.f32 %v2061, %v2732
        %v2817 = vadd.f32 %v2062, %v2731
        %v2818 = vadd.f32 %v2063, %v2733
        %v2819 = vadd.f32 %v2064, %v2732
        %v2820 = vadd.f32 %v2065, %v2736
        %v2821 = vadd.f32 %v2066, %v2738
        %v2822 = vadd.f32 %v2067, %v2737
        %v2823 = vpack.c.bf16 %v2770, %v2769
        %v2824 = vpack.c.bf16 %v2771, %v2771
        %v2825 = vpack.c.bf16 %v2773, %v2772
        %v2826 = vpack.c.bf16 %v2774, %v2774
        %v2827 = vpack.c.bf16 %v2776, %v2775
        %v2828 = vpack.c.bf16 %v2777, %v2777
        %v2829 = vpack.c.bf16 %v2779, %v2778
        %v2830 = vpack.c.bf16 %v2780, %v2780
        %v2831 = vpack.c.bf16 %v2782, %v2781
        %v2832 = vpack.c.bf16 %v2783, %v2783
        %v2833 = vpack.c.bf16 %v2785, %v2784
        %v2834 = vpack.c.bf16 %v2786, %v2786
        %v2835 = vpack.c.bf16 %v2788, %v2787
        %v2836 = vpack.c.bf16 %v2789, %v2789
        %v2837 = vpack.c.bf16 %v2791, %v2790
        %v2838 = vpack.c.bf16 %v2792, %v2792
        %v2839 = vpack.c.bf16 %v2794, %v2793
        %v2840 = vpack.c.bf16 %v2795, %v2795
        %v2841 = vpack.c.bf16 %v2797, %v2796
        %v2842 = vpack.c.bf16 %v2798, %v2798
        %v2843 = vpack.c.bf16 %v2800, %v2799
        %v2844 = vpack.c.bf16 %v2801, %v2801
        %v2845 = vpack.c.bf16 %v2803, %v2802
        %v2846 = vpack.c.bf16 %v2804, %v2804
        %v2847 = vpack.c.bf16 %v2806, %v2805
        %v2848 = vpack.c.bf16 %v2807, %v2807
        %v2849 = vpack.c.bf16 %v2809, %v2808
        %v2850 = vpack.c.bf16 %v2810, %v2810
        %v2851 = vpack.c.bf16 %v2812, %v2811
        %v2852 = vpack.c.bf16 %v2813, %v2813
        %v2853 = vpack.c.bf16 %v2815, %v2814
        %v2854 = vpack.c.bf16 %v2816, %v2816
        %v2855 = vpack.c.bf16 %v2818, %v2817
        %v2856 = vpack.c.bf16 %v2819, %v2819
        %v2857 = vpack.c.bf16 %v2821, %v2820
        %v2858 = vpack.c.bf16 %v2822, %v2822
        %vm2859 = vsmask.f32 7424
        %v2861 = vshrl.u32 %v2823, 16
        %v2863 = vshll.u32 %v2823, 16
        %v2865 = vrot.slane %v2863, 1
        %v2866 = vor.u32 %v2861, %v2865
        %v2868 = vshll.u32 %v2824, 16
        %v2870 = vrot.slane %v2868, 1
        %v2871 = vsel %vm2859, %v2866, %v2870
        %v2873 = vshrl.u32 %v2825, 16
        %v2875 = vshll.u32 %v2825, 16
        %v2877 = vrot.slane %v2875, 1
        %v2878 = vor.u32 %v2873, %v2877
        %v2880 = vshll.u32 %v2826, 16
        %v2882 = vrot.slane %v2880, 1
        %v2883 = vsel %vm2859, %v2878, %v2882
        %v2885 = vshrl.u32 %v2827, 16
        %v2887 = vshll.u32 %v2827, 16
        %v2889 = vrot.slane %v2887, 1
        %v2890 = vor.u32 %v2885, %v2889
        %v2892 = vshll.u32 %v2828, 16
        %v2894 = vrot.slane %v2892, 1
        %v2895 = vsel %vm2859, %v2890, %v2894
        %v2897 = vshrl.u32 %v2829, 16
        %v2899 = vshll.u32 %v2829, 16
        %v2901 = vrot.slane %v2899, 1
        %v2902 = vor.u32 %v2897, %v2901
        %v2904 = vshll.u32 %v2830, 16
        %v2906 = vrot.slane %v2904, 1
        %v2907 = vsel %vm2859, %v2902, %v2906
        %v2909 = vshrl.u32 %v2831, 16
        %v2911 = vshll.u32 %v2831, 16
        %v2913 = vrot.slane %v2911, 1
        %v2914 = vor.u32 %v2909, %v2913
        %v2916 = vshll.u32 %v2832, 16
        %v2918 = vrot.slane %v2916, 1
        %v2919 = vsel %vm2859, %v2914, %v2918
        %v2921 = vshrl.u32 %v2833, 16
        %v2923 = vshll.u32 %v2833, 16
        %v2925 = vrot.slane %v2923, 1
        %v2926 = vor.u32 %v2921, %v2925
        %v2928 = vshll.u32 %v2834, 16
        %v2930 = vrot.slane %v2928, 1
        %v2931 = vsel %vm2859, %v2926, %v2930
        %v2933 = vshrl.u32 %v2835, 16
        %v2935 = vshll.u32 %v2835, 16
        %v2937 = vrot.slane %v2935, 1
        %v2938 = vor.u32 %v2933, %v2937
        %v2940 = vshll.u32 %v2836, 16
        %v2942 = vrot.slane %v2940, 1
        %v2943 = vsel %vm2859, %v2938, %v2942
        %v2945 = vshrl.u32 %v2837, 16
        %v2947 = vshll.u32 %v2837, 16
        %v2949 = vrot.slane %v2947, 1
        %v2950 = vor.u32 %v2945, %v2949
        %v2952 = vshll.u32 %v2838, 16
        %v2954 = vrot.slane %v2952, 1
        %v2955 = vsel %vm2859, %v2950, %v2954
        %v2957 = vshrl.u32 %v2839, 16
        %v2959 = vshll.u32 %v2839, 16
        %v2961 = vrot.slane %v2959, 1
        %v2962 = vor.u32 %v2957, %v2961
        %v2964 = vshll.u32 %v2840, 16
        %v2966 = vrot.slane %v2964, 1
        %v2967 = vsel %vm2859, %v2962, %v2966
        %v2969 = vshrl.u32 %v2841, 16
        %v2971 = vshll.u32 %v2841, 16
        %v2973 = vrot.slane %v2971, 1
        %v2974 = vor.u32 %v2969, %v2973
        %v2976 = vshll.u32 %v2842, 16
        %v2978 = vrot.slane %v2976, 1
        %v2979 = vsel %vm2859, %v2974, %v2978
        %v2981 = vshrl.u32 %v2843, 16
        %v2983 = vshll.u32 %v2843, 16
        %v2985 = vrot.slane %v2983, 1
        %v2986 = vor.u32 %v2981, %v2985
        %v2988 = vshll.u32 %v2844, 16
        %v2990 = vrot.slane %v2988, 1
        %v2991 = vsel %vm2859, %v2986, %v2990
        %v2993 = vshrl.u32 %v2845, 16
        %v2995 = vshll.u32 %v2845, 16
        %v2997 = vrot.slane %v2995, 1
        %v2998 = vor.u32 %v2993, %v2997
        %v3000 = vshll.u32 %v2846, 16
        %v3002 = vrot.slane %v3000, 1
        %v3003 = vsel %vm2859, %v2998, %v3002
        %v3005 = vshrl.u32 %v2847, 16
        %v3007 = vshll.u32 %v2847, 16
        %v3009 = vrot.slane %v3007, 1
        %v3010 = vor.u32 %v3005, %v3009
        %v3012 = vshll.u32 %v2848, 16
        %v3014 = vrot.slane %v3012, 1
        %v3015 = vsel %vm2859, %v3010, %v3014
        %v3017 = vshrl.u32 %v2849, 16
        %v3019 = vshll.u32 %v2849, 16
        %v3021 = vrot.slane %v3019, 1
        %v3022 = vor.u32 %v3017, %v3021
        %v3024 = vshll.u32 %v2850, 16
        %v3026 = vrot.slane %v3024, 1
        %v3027 = vsel %vm2859, %v3022, %v3026
        %v3029 = vshrl.u32 %v2851, 16
        %v3031 = vshll.u32 %v2851, 16
        %v3033 = vrot.slane %v3031, 1
        %v3034 = vor.u32 %v3029, %v3033
        %v3036 = vshll.u32 %v2852, 16
        %v3038 = vrot.slane %v3036, 1
        %v3039 = vsel %vm2859, %v3034, %v3038
        %v3041 = vshrl.u32 %v2853, 16
        %v3043 = vshll.u32 %v2853, 16
        %v3045 = vrot.slane %v3043, 1
        %v3046 = vor.u32 %v3041, %v3045
        %v3048 = vshll.u32 %v2854, 16
        %v3050 = vrot.slane %v3048, 1
        %v3051 = vsel %vm2859, %v3046, %v3050
        %v3053 = vshrl.u32 %v2855, 16
        %v3055 = vshll.u32 %v2855, 16
        %v3057 = vrot.slane %v3055, 1
        %v3058 = vor.u32 %v3053, %v3057
        %v3060 = vshll.u32 %v2856, 16
        %v3062 = vrot.slane %v3060, 1
        %v3063 = vsel %vm2859, %v3058, %v3062
        %v3065 = vshrl.u32 %v2857, 16
        %v3067 = vshll.u32 %v2857, 16
        %v3069 = vrot.slane %v3067, 1
        %v3070 = vor.u32 %v3065, %v3069
        %v3072 = vshll.u32 %v2858, 16
        %v3074 = vrot.slane %v3072, 1
        %v3075 = vsel %vm2859, %v3070, %v3074
        %3076 = vrot.lane.b32.xlu0 %v2871, 8
        %v3077 = vpop.permute.xlu0 %3076
        %3078 = vrot.lane.b32.xlu0 %v2883, 8
        %v3079 = vpop.permute.xlu0 %3078
        %3080 = vrot.lane.b32.xlu0 %v2895, 8
        %v3081 = vpop.permute.xlu0 %3080
        %3082 = vrot.lane.b32.xlu0 %v2907, 8
        %v3083 = vpop.permute.xlu0 %3082
        %3084 = vrot.lane.b32.xlu0 %v2919, 8
        %v3085 = vpop.permute.xlu0 %3084
        %3086 = vrot.lane.b32.xlu0 %v2931, 8
        %v3087 = vpop.permute.xlu0 %3086
        %3088 = vrot.lane.b32.xlu0 %v2943, 8
        %v3089 = vpop.permute.xlu0 %3088
        %3090 = vrot.lane.b32.xlu0 %v2955, 8
        %v3091 = vpop.permute.xlu0 %3090
        %3092 = vrot.lane.b32.xlu0 %v2967, 8
        %v3093 = vpop.permute.xlu0 %3092
        %3094 = vrot.lane.b32.xlu0 %v2979, 8
        %v3095 = vpop.permute.xlu0 %3094
        %3096 = vrot.lane.b32.xlu0 %v2991, 8
        %v3097 = vpop.permute.xlu0 %3096
        %3098 = vrot.lane.b32.xlu0 %v3003, 8
        %v3099 = vpop.permute.xlu0 %3098
        %3100 = vrot.lane.b32.xlu0 %v3015, 8
        %v3101 = vpop.permute.xlu0 %3100
        %3102 = vrot.lane.b32.xlu0 %v3027, 8
        %v3103 = vpop.permute.xlu0 %3102
        %3104 = vrot.lane.b32.xlu0 %v3039, 8
        %v3105 = vpop.permute.xlu0 %3104
        %3106 = vrot.lane.b32.xlu0 %v3051, 8
        %v3107 = vpop.permute.xlu0 %3106
        %3108 = vrot.lane.b32.xlu0 %v3063, 8
        %v3109 = vpop.permute.xlu0 %3108
        %3110 = vrot.lane.b32.xlu0 %v3075, 8
        %v3111 = vpop.permute.xlu0 %3110
        %vm3148 = vcmask 1046528
        %v3149 = vrot.slane %v2823, 1
        %v3150 = vrot.slane %v2824, 1
        %v3151 = vsel %vm3148, %v3149, %v3150
        %v3152 = vrot.slane %v2825, 1
        %v3153 = vrot.slane %v2826, 1
        %v3154 = vsel %vm3148, %v3152, %v3153
        %v3155 = vrot.slane %v2827, 1
        %v3156 = vrot.slane %v2828, 1
        %v3157 = vsel %vm3148, %v3155, %v3156
        %v3158 = vrot.slane %v2829, 1
        %v3159 = vrot.slane %v2830, 1
        %v3160 = vsel %vm3148, %v3158, %v3159
        %v3161 = vrot.slane %v2831, 1
        %v3162 = vrot.slane %v2832, 1
        %v3163 = vsel %vm3148, %v3161, %v3162
        %v3164 = vrot.slane %v2833, 1
        %v3165 = vrot.slane %v2834, 1
        %v3166 = vsel %vm3148, %v3164, %v3165
        %v3167 = vrot.slane %v2835, 1
        %v3168 = vrot.slane %v2836, 1
        %v3169 = vsel %vm3148, %v3167, %v3168
        %v3170 = vrot.slane %v2837, 1
        %v3171 = vrot.slane %v2838, 1
        %v3172 = vsel %vm3148, %v3170, %v3171
        %v3173 = vrot.slane %v2839, 1
        %v3174 = vrot.slane %v2840, 1
        %v3175 = vsel %vm3148, %v3173, %v3174
        %v3176 = vrot.slane %v2841, 1
        %v3177 = vrot.slane %v2842, 1
        %v3178 = vsel %vm3148, %v3176, %v3177
        %v3179 = vrot.slane %v2843, 1
        %v3180 = vrot.slane %v2844, 1
        %v3181 = vsel %vm3148, %v3179, %v3180
        %v3182 = vrot.slane %v2845, 1
        %v3183 = vrot.slane %v2846, 1
        %v3184 = vsel %vm3148, %v3182, %v3183
        %v3185 = vrot.slane %v2847, 1
        %v3186 = vrot.slane %v2848, 1
        %v3187 = vsel %vm3148, %v3185, %v3186
        %v3188 = vrot.slane %v2849, 1
        %v3189 = vrot.slane %v2850, 1
        %v3190 = vsel %vm3148, %v3188, %v3189
        %v3191 = vrot.slane %v2851, 1
        %v3192 = vrot.slane %v2852, 1
        %v3193 = vsel %vm3148, %v3191, %v3192
        %v3194 = vrot.slane %v2853, 1
        %v3195 = vrot.slane %v2854, 1
        %v3196 = vsel %vm3148, %v3194, %v3195
        %v3197 = vrot.slane %v2855, 1
        %v3198 = vrot.slane %v2856, 1
        %v3199 = vsel %vm3148, %v3197, %v3198
        %v3200 = vrot.slane %v2857, 1
        %v3201 = vrot.slane %v2858, 1
        %v3202 = vsel %vm3148, %v3200, %v3201
        %3203 = vrot.lane.b32.xlu0 %v3151, 16
        %v3204 = vpop.permute.xlu0 %3203
        %3205 = vrot.lane.b32.xlu0 %v3154, 16
        %v3206 = vpop.permute.xlu0 %3205
        %3207 = vrot.lane.b32.xlu0 %v3157, 16
        %v3208 = vpop.permute.xlu0 %3207
        %3209 = vrot.lane.b32.xlu0 %v3160, 16
        %v3210 = vpop.permute.xlu0 %3209
        %3211 = vrot.lane.b32.xlu0 %v3163, 16
        %v3212 = vpop.permute.xlu0 %3211
        %3213 = vrot.lane.b32.xlu0 %v3166, 16
        %v3214 = vpop.permute.xlu0 %3213
        %3215 = vrot.lane.b32.xlu0 %v3169, 16
        %v3216 = vpop.permute.xlu0 %3215
        %3217 = vrot.lane.b32.xlu0 %v3172, 16
        %v3218 = vpop.permute.xlu0 %3217
        %3219 = vrot.lane.b32.xlu0 %v3175, 16
        %v3220 = vpop.permute.xlu0 %3219
        %3221 = vrot.lane.b32.xlu0 %v3178, 16
        %v3222 = vpop.permute.xlu0 %3221
        %3223 = vrot.lane.b32.xlu0 %v3181, 16
        %v3224 = vpop.permute.xlu0 %3223
        %3225 = vrot.lane.b32.xlu0 %v3184, 16
        %v3226 = vpop.permute.xlu0 %3225
        %3227 = vrot.lane.b32.xlu0 %v3187, 16
        %v3228 = vpop.permute.xlu0 %3227
        %3229 = vrot.lane.b32.xlu0 %v3190, 16
        %v3230 = vpop.permute.xlu0 %3229
        %3231 = vrot.lane.b32.xlu0 %v3193, 16
        %v3232 = vpop.permute.xlu0 %3231
        %3233 = vrot.lane.b32.xlu0 %v3196, 16
        %v3234 = vpop.permute.xlu0 %3233
        %3235 = vrot.lane.b32.xlu0 %v3199, 16
        %v3236 = vpop.permute.xlu0 %3235
        %3237 = vrot.lane.b32.xlu0 %v3202, 16
        %v3238 = vpop.permute.xlu0 %3237
        %vm3239 = vcmask 64512
        %v3241 = vsel %vm3239, %v2823, %v3077
        %v3243 = vsel %vm3239, %v2825, %v3079
        %v3245 = vsel %vm3239, %v2827, %v3081
        %v3247 = vsel %vm3239, %v2829, %v3083
        %v3249 = vsel %vm3239, %v2831, %v3085
        %v3251 = vsel %vm3239, %v2833, %v3087
        %v3253 = vsel %vm3239, %v2835, %v3089
        %v3255 = vsel %vm3239, %v2837, %v3091
        %v3257 = vsel %vm3239, %v2839, %v3093
        %v3259 = vsel %vm3239, %v2841, %v3095
        %v3261 = vsel %vm3239, %v2843, %v3097
        %v3263 = vsel %vm3239, %v2845, %v3099
        %v3265 = vsel %vm3239, %v2847, %v3101
        %v3267 = vsel %vm3239, %v2849, %v3103
        %v3269 = vsel %vm3239, %v2851, %v3105
        %v3271 = vsel %vm3239, %v2853, %v3107
        %v3273 = vsel %vm3239, %v2855, %v3109
        %v3275 = vsel %vm3239, %v2857, %v3111
        %vm3276 = vcmask 130048
        %v3278 = vsel %vm3276, %v3241, %v3204
        %v3280 = vsel %vm3276, %v3243, %v3206
        %v3282 = vsel %vm3276, %v3245, %v3208
        %v3284 = vsel %vm3276, %v3247, %v3210
        %v3286 = vsel %vm3276, %v3249, %v3212
        %v3288 = vsel %vm3276, %v3251, %v3214
        %v3290 = vsel %vm3276, %v3253, %v3216
        %v3292 = vsel %vm3276, %v3255, %v3218
        %v3294 = vsel %vm3276, %v3257, %v3220
        %v3296 = vsel %vm3276, %v3259, %v3222
        %v3298 = vsel %vm3276, %v3261, %v3224
        %v3300 = vsel %vm3276, %v3263, %v3226
        %v3302 = vsel %vm3276, %v3265, %v3228
        %v3304 = vsel %vm3276, %v3267, %v3230
        %v3306 = vsel %vm3276, %v3269, %v3232
        %v3308 = vsel %vm3276, %v3271, %v3234
        %v3310 = vsel %vm3276, %v3273, %v3236
        %v3312 = vsel %vm3276, %v3275, %v3238
        %3329 = vrot.lane.b32.xlu0 %v3280, 24
        %v3330 = vpop.permute.xlu0 %3329
        %3331 = vrot.lane.b32.xlu0 %v3282, 24
        %v3332 = vpop.permute.xlu0 %3331
        %3333 = vrot.lane.b32.xlu0 %v3284, 24
        %v3334 = vpop.permute.xlu0 %3333
        %3335 = vrot.lane.b32.xlu0 %v3286, 24
        %v3336 = vpop.permute.xlu0 %3335
        %3337 = vrot.lane.b32.xlu0 %v3288, 24
        %v3338 = vpop.permute.xlu0 %3337
        %3339 = vrot.lane.b32.xlu0 %v3290, 24
        %v3340 = vpop.permute.xlu0 %3339
        %3341 = vrot.lane.b32.xlu0 %v3292, 24
        %v3342 = vpop.permute.xlu0 %3341
        %3343 = vrot.lane.b32.xlu0 %v3294, 24
        %v3344 = vpop.permute.xlu0 %3343
        %3345 = vrot.lane.b32.xlu0 %v3296, 24
        %v3346 = vpop.permute.xlu0 %3345
        %3347 = vrot.lane.b32.xlu0 %v3298, 24
        %v3348 = vpop.permute.xlu0 %3347
        %3349 = vrot.lane.b32.xlu0 %v3300, 24
        %v3350 = vpop.permute.xlu0 %3349
        %3351 = vrot.lane.b32.xlu0 %v3302, 24
        %v3352 = vpop.permute.xlu0 %3351
        %3353 = vrot.lane.b32.xlu0 %v3304, 24
        %v3354 = vpop.permute.xlu0 %3353
        %3355 = vrot.lane.b32.xlu0 %v3306, 24
        %v3356 = vpop.permute.xlu0 %3355
        %3357 = vrot.lane.b32.xlu0 %v3308, 24
        %v3358 = vpop.permute.xlu0 %3357
        %3359 = vrot.lane.b32.xlu0 %v3310, 24
        %v3360 = vpop.permute.xlu0 %3359
        %3362 = vrot.lane.b32.xlu0 %v3282, 48
        %v3363 = vpop.permute.xlu0 %3362
        %3364 = vrot.lane.b32.xlu0 %v3284, 48
        %v3365 = vpop.permute.xlu0 %3364
        %3366 = vrot.lane.b32.xlu0 %v3286, 48
        %v3367 = vpop.permute.xlu0 %3366
        %3368 = vrot.lane.b32.xlu0 %v3288, 48
        %v3369 = vpop.permute.xlu0 %3368
        %3370 = vrot.lane.b32.xlu0 %v3290, 48
        %v3371 = vpop.permute.xlu0 %3370
        %3372 = vrot.lane.b32.xlu0 %v3292, 48
        %v3373 = vpop.permute.xlu0 %3372
        %3374 = vrot.lane.b32.xlu0 %v3294, 48
        %v3375 = vpop.permute.xlu0 %3374
        %3376 = vrot.lane.b32.xlu0 %v3296, 48
        %v3377 = vpop.permute.xlu0 %3376
        %3378 = vrot.lane.b32.xlu0 %v3298, 48
        %v3379 = vpop.permute.xlu0 %3378
        %3380 = vrot.lane.b32.xlu0 %v3300, 48
        %v3381 = vpop.permute.xlu0 %3380
        %3382 = vrot.lane.b32.xlu0 %v3302, 48
        %v3383 = vpop.permute.xlu0 %3382
        %3384 = vrot.lane.b32.xlu0 %v3304, 48
        %v3385 = vpop.permute.xlu0 %3384
        %3386 = vrot.lane.b32.xlu0 %v3306, 48
        %v3387 = vpop.permute.xlu0 %3386
        %3388 = vrot.lane.b32.xlu0 %v3308, 48
        %v3389 = vpop.permute.xlu0 %3388
        %3390 = vrot.lane.b32.xlu0 %v3310, 48
        %v3391 = vpop.permute.xlu0 %3390
        %3392 = vrot.lane.b32.xlu0 %v3312, 48
        %v3393 = vpop.permute.xlu0 %3392
        %vm3394 = vcmask 195584
        %v3396 = vsel %vm3394, %v3278, %v3330
        %v3398 = vsel %vm3394, %v3280, %v3332
        %v3400 = vsel %vm3394, %v3282, %v3334
        %v3402 = vsel %vm3394, %v3284, %v3336
        %v3404 = vsel %vm3394, %v3286, %v3338
        %v3406 = vsel %vm3394, %v3288, %v3340
        %v3408 = vsel %vm3394, %v3290, %v3342
        %v3410 = vsel %vm3394, %v3292, %v3344
        %v3412 = vsel %vm3394, %v3294, %v3346
        %v3414 = vsel %vm3394, %v3296, %v3348
        %v3416 = vsel %vm3394, %v3298, %v3350
        %v3418 = vsel %vm3394, %v3300, %v3352
        %v3420 = vsel %vm3394, %v3302, %v3354
        %v3422 = vsel %vm3394, %v3304, %v3356
        %v3424 = vsel %vm3394, %v3306, %v3358
        %v3426 = vsel %vm3394, %v3308, %v3360
        %vm3427 = vcmask 392192
        %v3429 = vsel %vm3427, %v3396, %v3363
        %v3431 = vsel %vm3427, %v3398, %v3365
        %v3433 = vsel %vm3427, %v3400, %v3367
        %v3435 = vsel %vm3427, %v3402, %v3369
        %v3437 = vsel %vm3427, %v3404, %v3371
        %v3439 = vsel %vm3427, %v3406, %v3373
        %v3441 = vsel %vm3427, %v3408, %v3375
        %v3443 = vsel %vm3427, %v3410, %v3377
        %v3445 = vsel %vm3427, %v3412, %v3379
        %v3447 = vsel %vm3427, %v3414, %v3381
        %v3449 = vsel %vm3427, %v3416, %v3383
        %v3451 = vsel %vm3427, %v3418, %v3385
        %v3453 = vsel %vm3427, %v3420, %v3387
        %v3455 = vsel %vm3427, %v3422, %v3389
        %v3457 = vsel %vm3427, %v3424, %v3391
        %v3459 = vsel %vm3427, %v3426, %v3393
        %v3460 = vld [vmem:[%s2] sm:$0xf]
        %v3461 = vld [vmem:[%s3] sm:$0xff]
        %3463 = vset.pattern.permute.xlu0 0
        %3464 = vperm.xlu0 %3463, %v3461
        %v3465 = vpop.permute.xlu0 %3464
        %vm3467 = vcmask 588800
        %v3469 = vsel %vm3467, %v3460, 0
        %v3471 = vsel %vm3467, %v3429, 0
        %v3473 = vsel %vm3467, %v3431, 0
        %v3475 = vsel %vm3467, %v3433, 0
        %v3477 = vsel %vm3467, %v3435, 0
        %v3479 = vsel %vm3467, %v3437, 0
        %v3481 = vsel %vm3467, %v3439, 0
        %v3483 = vsel %vm3467, %v3441, 0
        %v3485 = vsel %vm3467, %v3443, 0
        %v3487 = vsel %vm3467, %v3445, 0
        %v3489 = vsel %vm3467, %v3447, 0
        %v3491 = vsel %vm3467, %v3449, 0
        %v3493 = vsel %vm3467, %v3451, 0
        %v3495 = vsel %vm3467, %v3453, 0
        %v3497 = vsel %vm3467, %v3455, 0
        %v3499 = vsel %vm3467, %v3457, 0
        %v3501 = vsel %vm3467, %v3459, 0
        %3503 = vmatprep.subr.bf16.mxu0 0
        %3504 = vmatpush1.bf16.xpose.msra.mxu0 %v3471
        %3505 = vmatprep.subr.bf16.mxu0 0
        %3506 = vmatpush1.bf16.xpose.msra.mxu0 %v3473
        %3507 = vmatprep.subr.bf16.mxu0 0
        %3508 = vmatpush1.bf16.xpose.msra.mxu0 %v3475
        %3509 = vmatprep.subr.bf16.mxu0 0
        %3510 = vmatpush1.bf16.xpose.msra.mxu0 %v3477
        %3511 = vmatprep.subr.bf16.mxu0 0
        %3512 = vmatpush1.bf16.xpose.msra.mxu0 %v3479
        %3513 = vmatprep.subr.bf16.mxu0 0
        %3514 = vmatpush1.bf16.xpose.msra.mxu0 %v3481
        %3515 = vmatprep.subr.bf16.mxu0 0
        %3516 = vmatpush1.bf16.xpose.msra.mxu0 %v3483
        %3517 = vmatprep.subr.bf16.mxu0 0
        %3518 = vmatpush1.bf16.xpose.msra.mxu0 %v3485
        %3519 = vmatprep.subr.bf16.mxu0 0
        %3520 = vmatpush1.bf16.xpose.msra.mxu0 %v3487
        %3521 = vmatprep.subr.bf16.mxu0 0
        %3522 = vmatpush1.bf16.xpose.msra.mxu0 %v3489
        %3523 = vmatprep.subr.bf16.mxu0 0
        %3524 = vmatpush1.bf16.xpose.msra.mxu0 %v3491
        %3525 = vmatprep.subr.bf16.mxu0 0
        %3526 = vmatpush1.bf16.xpose.msra.mxu0 %v3493
        %3527 = vmatprep.subr.bf16.mxu0 0
        %3528 = vmatpush1.bf16.xpose.msra.mxu0 %v3495
        %3529 = vmatprep.subr.bf16.mxu0 0
        %3530 = vmatpush1.bf16.xpose.msra.mxu0 %v3497
        %3531 = vmatprep.subr.bf16.mxu0 0
        %3532 = vmatpush1.bf16.xpose.msra.mxu0 %v3499
        %3533 = vmatprep.subr.bf16.mxu0 0
        %3534 = vmatpush1.bf16.xpose.msra.mxu0 %v3501
        %3535 = vmatprep.mubr.bf16.mxu0 0
        %3536 = vmatmul.mubr.bf16.gmra.mrb[0].mxu0 %v3469
        %v3537 = vpop.f32.mrb[0].mxu0
        %v3538 = vadd.f32 %v3465, %v3537
        %v3539 = vpop.f32.mrb[0].mxu0
        %v3540 = vadd.f32 %v3465, %v3539
        %v3541 = vpop.f32.mrb[0].mxu0
        %v3542 = vpop.f32.mrb[0].mxu0
        %3543 = vdwg.mxu0
        %v3544 = vmax.f32 %v3538, 0.0
        %v3545 = vmax.f32 %v3540, 0.0
        %3546 = vst [vmem:[%s219] sm:$0xff] %v3544
        %3547 = vst [vmem:[%s219 + $0x8] sm:$0xff] %v3545
        %s3548 = sand.u32 %s134, 1
        %s3549 = scalar_lea.sflag [#allocation3], %s3548
        %s3550 = sand.u32 %s134, 1
        %s3551 = smul.addr %s3550, 16
        %s3552 = scalar_lea.vmem [#allocation2], %s3551
        // Predicated region
        $region37: #{tpu_custom_call.1} parent=35 // pred_check
          %p3553 = pneg %p144
        $region38: #{tpu_custom_call.1} parent=35 // pred_check_branch
          %3555 = sbr.rel (%p3553) target = $region40
        $region39: #{tpu_custom_call.1} parent=35 // pred_region
          %s3556 = smul.u32 2, %s23
          %s3558 = ssub.s32 256, 256
          %3559 = vsyncadd %s3549, %s3558
          %s3560 = smul.addr %s22, 2
          %s3561 = sadd.s32 %s3556, %s3560
          %s3562 = smul.addr %s3561, 128
          %s3563 = scalar_lea.hbm %s4, %s3562
          %s3565 = sshll.u32 %s3552, 4
          %s3566 = int_to_ptr.vmem [resolvable:$true] %s3565
          %3568 = dma.vmem_to_hbm [thread:$0]  %s3566, 256, %s3563, %s3549
        $region40: #{tpu_custom_call.1} parent=35 // pred_fallthru
          _
      $region36: #{tpu_custom_call.1} parent=5 // pred_fallthru
        _
      %p3569 = scmp.le.s32.totalorder 2, %s13
      // Predicated region
      $region41: #{tpu_custom_call.1} parent=5 // pred_check
        %p3570 = pneg %p3569
      $region42: #{tpu_custom_call.1} parent=5 // pred_check_branch
        %3572 = sbr.rel (%p3570) target = $region44
      $region43: #{tpu_custom_call.1} parent=5 // pred_region
        %s3573 = ssub.s32 %s13, 2
        // Predicated region
        $region45: #{tpu_custom_call.1} parent=43 // pred_check
          %p3574 = pneg %p150
        $region46: #{tpu_custom_call.1} parent=43 // pred_check_branch
          %3576 = sbr.rel (%p3574) target = $region48
        $region47: #{tpu_custom_call.1} parent=43 // pred_region
          %s3577 = sand.u32 %s135, 1
          %s3578 = scalar_lea.sflag [#allocation3], %s3577
          %s3579 = sand.u32 %s135, 1
          %s3580 = smul.addr %s3579, 16
          %s3581 = scalar_lea.vmem [#allocation2], %s3580
          %3582 = dma.done %s3578, 256
        $region48: #{tpu_custom_call.1} parent=43 // pred_fallthru
          _
      $region44: #{tpu_custom_call.1} parent=5 // pred_fallthru
        _
    $region6: #{tpu_custom_call.1} parent=1 // loop_footer
      %s17 = sadd.s32 1, %s13
    $region7: #{tpu_custom_call.1} parent=1 // loop_footer_branch
      %12 = sbr.rel target = $region3
    $region8: #{tpu_custom_call.1} parent=1 // loop_exit
      _
    %3583 = vsyncpa [#allocation3], 1
    %s3584 = scalar_lea.sflag [#allocation3], 1
    %3585 = vsyncpa %s3584, 1

</llo_original>
